<compile_context>
chip_gen: v5e
topology: v5e:2x2
jax: 0.10.0
libtpu: 0.0.40
codegen_flags: <defaults>
</compile_context>

<pallas_src>
import jax
import jax.numpy as jnp
import numpy as np
from jax.experimental import pallas as pl
from jax.experimental.pallas import tpu as pltpu


def _round_up(x, m):
    return (x + m - 1) // m * m


# --------------------------------------------------------------------------
# Conv(3x3, valid) + bias + ReLU + MaxPool(2x2, stride 2, floor) kernel.
# Pool is folded into the GEMM via 4 strided im2col "phases"; the kernel does
# 4 GEMMs + elementwise max + bias + ReLU.  No selector matrices.
# --------------------------------------------------------------------------
def _conv_relu_pool_kernel(w_ref, b_ref, p_ref, o_ref):
    """w_ref: (Cout_p, 9*Cin) bf16, b_ref: (Cout_p, 1) f32,
    p_ref: (4, 9*Cin, L) bf16 (4 pooling phases, L lane-padded spatial*batch),
    o_ref: (Cout_p, L) f32."""
    w = w_ref[...]
    m = jnp.dot(w, p_ref[0], preferred_element_type=jnp.float32)
    m = jnp.maximum(m, jnp.dot(w, p_ref[1], preferred_element_type=jnp.float32))
    m = jnp.maximum(m, jnp.dot(w, p_ref[2], preferred_element_type=jnp.float32))
    m = jnp.maximum(m, jnp.dot(w, p_ref[3], preferred_element_type=jnp.float32))
    # bias is phase-invariant and ReLU is monotone, so max->bias->relu is exact.
    o_ref[...] = jnp.maximum(m + b_ref[...], 0.0)


def conv3x3_relu_pool(x, w, b):
    n, cin, h, wdt = x.shape
    cout = w.shape[0]
    ho, wo = h - 2, wdt - 2
    hp, wp = ho // 2, wo // 2          # floor pooling
    hw = hp * wp
    K = cin * 9

    # Batch blocking: fold a block of images into the lane axis, keep (up to)
    # 2 independent grid steps for v7x's 2 TensorCores.
    bb = max(1, n // 2)
    while n % bb:
        bb -= 1
    nb = n // bb
    lanes = _round_up(bb * hw, 128)    # lane-dense, unmasked stores
    cout_p = _round_up(cout, 8)        # full sublane width

    # 4-phase strided im2col (pure data movement, wrapper-side).
    # Phase (dr, dc) evaluates the conv at output positions (2r+dr, 2c+dc).
    phases = []
    for dr in (0, 1):
        for dc in (0, 1):
            cols = [x[:, :,
                      dr + kh: dr + kh + 2 * hp - 1: 2,
                      dc + kw: dc + kw + 2 * wp - 1: 2]
                    for kh in range(3) for kw in range(3)]     # each (n,cin,hp,wp)
            ph = jnp.stack(cols, axis=2).reshape(n, K, hw)     # k = ci*9+kh*3+kw
            phases.append(ph)
    p = jnp.stack(phases, axis=0)                              # (4, n, K, hw)
    p = p.transpose(1, 0, 2, 3).reshape(nb, bb, 4, K, hw)
    p = p.transpose(0, 2, 3, 1, 4).reshape(nb, 4, K, bb * hw)  # batch into lanes
    p = jnp.pad(p, ((0, 0), (0, 0), (0, 0), (0, lanes - bb * hw)))
    p = p.astype(jnp.bfloat16)

    w2d = jnp.pad(w.reshape(cout, K), ((0, cout_p - cout), (0, 0)))
    w2d = w2d.astype(jnp.bfloat16)
    b2d = jnp.pad(b.reshape(cout, 1).astype(jnp.float32),
                  ((0, cout_p - cout), (0, 0)))

    out = pl.pallas_call(
        _conv_relu_pool_kernel,
        out_shape=jax.ShapeDtypeStruct((nb, cout_p, lanes), jnp.float32),
        grid=(nb,),
        in_specs=[
            pl.BlockSpec((cout_p, K), lambda i: (0, 0)),            # weights
            pl.BlockSpec((cout_p, 1), lambda i: (0, 0)),            # bias
            pl.BlockSpec((None, 4, K, lanes), lambda i: (i, 0, 0, 0)),  # patches
        ],
        out_specs=pl.BlockSpec((None, cout_p, lanes), lambda i: (i, 0, 0)),
        compiler_params=pltpu.CompilerParams(
            dimension_semantics=("parallel",)),
    )(w2d, b2d, p)

    # Strip padding and restore (n, cout, hp, wp).
    out = out[:, :cout, :bb * hw]
    out = out.reshape(nb, cout, bb, hw).transpose(0, 2, 1, 3)
    return out.reshape(n, cout, hp, wp)


# --------------------------------------------------------------------------
# Fused fc1(+ReLU) -> fc2(+ReLU) -> fc3 kernel, fc1 K-tiled over the grid.
# Weights pre-transposed to (in, out) in the wrapper; bf16 operands, f32 acc.
# --------------------------------------------------------------------------
def _mlp_kernel(x_ref, w1_ref, b1_ref, w2_ref, b2_ref, w3_ref, b3_ref,
                o_ref, acc_ref):
    k = pl.program_id(0)

    @pl.when(k == 0)
    def _():
        acc_ref[...] = jnp.zeros_like(acc_ref)

    acc_ref[...] += jnp.dot(x_ref[...], w1_ref[...],
                            preferred_element_type=jnp.float32)

    @pl.when(k == pl.num_programs(0) - 1)
    def _():
        h = jnp.maximum(acc_ref[...] + b1_ref[...], 0.0)
        h = jnp.dot(h.astype(jnp.bfloat16), w2_ref[...],
                    preferred_element_type=jnp.float32)
        h = jnp.maximum(h + b2_ref[...], 0.0)
        h = jnp.dot(h.astype(jnp.bfloat16), w3_ref[...],
                    preferred_element_type=jnp.float32)
        o_ref[...] = h + b3_ref[...]


def mlp_head(x, params):
    n, kin = x.shape
    w1, b1 = params["fc1_w"], params["fc1_b"]
    w2, b2 = params["fc2_w"], params["fc2_b"]
    w3, b3 = params["fc3_w"], params["fc3_b"]
    d1, d2, dout = w1.shape[0], w2.shape[0], w3.shape[0]
    d1p, d2p, doutp = (_round_up(d, 128) for d in (d1, d2, dout))

    # K tiling for fc1 (keeps the 85264-feature case VMEM-safe on v7x).
    kp = _round_up(kin, 128)
    tk = kp if kp <= 2048 else 2048
    kp = _round_up(kin, tk)
    kt = kp // tk

    def pad2(a, rows, cols):
        return jnp.pad(a, ((0, rows - a.shape[0]), (0, cols - a.shape[1])))

    xb = pad2(x.astype(jnp.float32), n, kp).astype(jnp.bfloat16)
    w1t = pad2(w1.T, kp, d1p).astype(jnp.bfloat16)     # (in, out) layout
    w2t = pad2(w2.T, d1p, d2p).astype(jnp.bfloat16)
    w3t = pad2(w3.T, d2p, doutp).astype(jnp.bfloat16)
    b1p = jnp.pad(b1.astype(jnp.float32), (0, d1p - d1)).reshape(1, d1p)
    b2p = jnp.pad(b2.astype(jnp.float32), (0, d2p - d2)).reshape(1, d2p)
    b3p = jnp.pad(b3.astype(jnp.float32), (0, doutp - dout)).reshape(1, doutp)

    out = pl.pallas_call(
        _mlp_kernel,
        out_shape=jax.ShapeDtypeStruct((n, doutp), jnp.float32),
        grid=(kt,),
        in_specs=[
            pl.BlockSpec((n, tk), lambda k: (0, k)),        # x  (K-tiled)
            pl.BlockSpec((tk, d1p), lambda k: (k, 0)),      # fc1 weight tile
            pl.BlockSpec((1, d1p), lambda k: (0, 0)),
            pl.BlockSpec((d1p, d2p), lambda k: (0, 0)),
            pl.BlockSpec((1, d2p), lambda k: (0, 0)),
            pl.BlockSpec((d2p, doutp), lambda k: (0, 0)),
            pl.BlockSpec((1, doutp), lambda k: (0, 0)),
        ],
        out_specs=pl.BlockSpec((n, doutp), lambda k: (0, 0)),
        scratch_shapes=[pltpu.VMEM((n, d1p), jnp.float32)],
        compiler_params=pltpu.CompilerParams(
            dimension_semantics=("arbitrary",)),
    )(xb, w1t, b1p, w2t, b2p, w3t, b3p)
    return out[:, :dout]


# --------------------------------------------------------------------------
# Full forward pass (glue in plain JAX, compute in Pallas kernels).
# --------------------------------------------------------------------------
def conv3_forward(params, x):
    h = conv3x3_relu_pool(x, params["conv1_w"], params["conv1_b"])
    h = conv3x3_relu_pool(h, params["conv2_w"], params["conv2_b"])
    h = h.reshape(h.shape[0], -1)          # == x.view(-1, C*H*W), NCHW order
    return mlp_head(h, params)


def init_params(key, num_classes, fc1_in):
    ks = jax.random.split(key, 10)

    def uni(k, shape, fan_in):
        bound = 1.0 / np.sqrt(fan_in)
        return jax.random.uniform(k, shape, jnp.float32, -bound, bound)

    return {
        "conv1_w": uni(ks[0], (6, 3, 3, 3), 3 * 9),
        "conv1_b": uni(ks[1], (6,), 3 * 9),
        "conv2_w": uni(ks[2], (16, 6, 3, 3), 6 * 9),
        "conv2_b": uni(ks[3], (16,), 6 * 9),
        "fc1_w": uni(ks[4], (120, fc1_in), fc1_in),
        "fc1_b": uni(ks[5], (120,), fc1_in),
        "fc2_w": uni(ks[6], (84, 120), 120),
        "fc2_b": uni(ks[7], (84,), 120),
        "fc3_w": uni(ks[8], (num_classes, 84), 84),
        "fc3_b": uni(ks[9], (num_classes,), 84),
    }


def _ref_forward(params, x):
    """Pure-JAX f32 reference mirroring the PyTorch forward, for validation."""
    def conv_block(h, w, b):
        y = jax.lax.conv_general_dilated(
            h, w, (1, 1), "VALID", dimension_numbers=("NCHW", "OIHW", "NCHW"))
        y = jnp.maximum(y + b.reshape(1, -1, 1, 1), 0.0)
        return jax.lax.reduce_window(y, -jnp.inf, jax.lax.max,
                                     (1, 1, 2, 2), (1, 1, 2, 2), "VALID")

    h = conv_block(x, params["conv1_w"], params["conv1_b"])
    h = conv_block(h, params["conv2_w"], params["conv2_b"])
    h = h.reshape(h.shape[0], -1)
    h = jnp.maximum(h @ params["fc1_w"].T + params["fc1_b"], 0.0)
    h = jnp.maximum(h @ params["fc2_w"].T + params["fc2_b"], 0.0)
    return h @ params["fc3_w"].T + params["fc3_b"]


if __name__ == "__main__":
    num_classes = 10
    batch, spatial = 2, 32

    # Forward-implied shapes: 32 -> conv(30) -> pool(15) -> conv(13) -> pool(6)
    hp2 = ((spatial - 2) // 2 - 2) // 2
    fc1_in = 16 * hp2 * hp2                     # 576 at spatial=32

    key = jax.random.PRNGKey(0)
    k_x, k_p = jax.random.split(key)
    x = jax.random.normal(k_x, (batch, 3, spatial, spatial), jnp.float32)
    params = init_params(k_p, num_classes, fc1_in)

    out = jax.block_until_ready(jax.jit(conv3_forward)(params, x))
    ref = jax.block_until_ready(jax.jit(_ref_forward)(params, x))

    assert out.shape == (batch, num_classes), out.shape
    # bf16 MXU operands with f32 accumulation vs. an all-f32 reference.
    err = np.max(np.abs(np.asarray(out) - np.asarray(ref)))
    assert np.allclose(np.asarray(out), np.asarray(ref),
                       atol=2e-2, rtol=2e-2), err
    print("KERNEL_OK")
</pallas_src>

<mosaic_0001>
module attributes {stable_mosaic.version = 11 : i64} {
  func.func @_conv_relu_pool_kernel(%arg0: i32, %arg1: memref<8x27xbf16, #tpu.memory_space<vmem>>, %arg2: memref<8x1xf32, #tpu.memory_space<vmem>>, %arg3: memref<1x4x27x256xbf16, #tpu.memory_space<vmem>>, %arg4: memref<1x8x256xf32, #tpu.memory_space<vmem>>) attributes {dimension_semantics = [#tpu.dimension_semantics<parallel>], iteration_bounds = array<i64: 2>, scalar_prefetch = 0 : i64, scratch_operands = 0 : i64, tpu.core_type = #tpu.core_type<tc>, window_params = [{pipeline_mode = #tpu.pipeline_mode<synchronous>, transform_indices = @transform_0, window_bounds = array<i64: 8, 27>}, {pipeline_mode = #tpu.pipeline_mode<synchronous>, transform_indices = @transform_1, window_bounds = array<i64: 8, 1>}, {transform_indices = @transform_2, window_bounds = array<i64: 1, 4, 27, 256>}, {transform_indices = @transform_3, window_bounds = array<i64: 1, 8, 256>}]} {
    %c0 = arith.constant 0 : index
    %c0_0 = arith.constant 0 : index
    %0 = vector.load %arg1[%c0, %c0_0] : memref<8x27xbf16, #tpu.memory_space<vmem>>, vector<8x27xbf16>
    %c0_1 = arith.constant 0 : index
    %c0_2 = arith.constant 0 : index
    %c0_3 = arith.constant 0 : index
    %c0_4 = arith.constant 0 : index
    %1 = vector.load %arg3[%c0_1, %c0_2, %c0_3, %c0_4] : memref<1x4x27x256xbf16, #tpu.memory_space<vmem>>, vector<1x1x27x256xbf16>
    %2 = vector.shape_cast %1 : vector<1x1x27x256xbf16> to vector<27x256xbf16>
    %cst = arith.constant dense<0.000000e+00> : vector<8x256xf32>
    %3 = tpu.matmul %0, %2, %cst {dimension_numbers = #tpu.dot_dimension_numbers<[1], [0], [0], [1], [0, 0, 1, 1], [], []>} : vector<8x27xbf16>, vector<27x256xbf16>, vector<8x256xf32> -> vector<8x256xf32>
    %c0_5 = arith.constant 0 : index
    %c1 = arith.constant 1 : index
    %c0_6 = arith.constant 0 : index
    %c0_7 = arith.constant 0 : index
    %4 = vector.load %arg3[%c0_5, %c1, %c0_6, %c0_7] : memref<1x4x27x256xbf16, #tpu.memory_space<vmem>>, vector<1x1x27x256xbf16>
    %5 = vector.shape_cast %4 : vector<1x1x27x256xbf16> to vector<27x256xbf16>
    %cst_8 = arith.constant dense<0.000000e+00> : vector<8x256xf32>
    %6 = tpu.matmul %0, %5, %cst_8 {dimension_numbers = #tpu.dot_dimension_numbers<[1], [0], [0], [1], [0, 0, 1, 1], [], []>} : vector<8x27xbf16>, vector<27x256xbf16>, vector<8x256xf32> -> vector<8x256xf32>
    %7 = arith.maximumf %3, %6 : vector<8x256xf32>
    %c0_9 = arith.constant 0 : index
    %c2 = arith.constant 2 : index
    %c0_10 = arith.constant 0 : index
    %c0_11 = arith.constant 0 : index
    %8 = vector.load %arg3[%c0_9, %c2, %c0_10, %c0_11] : memref<1x4x27x256xbf16, #tpu.memory_space<vmem>>, vector<1x1x27x256xbf16>
    %9 = vector.shape_cast %8 : vector<1x1x27x256xbf16> to vector<27x256xbf16>
    %cst_12 = arith.constant dense<0.000000e+00> : vector<8x256xf32>
    %10 = tpu.matmul %0, %9, %cst_12 {dimension_numbers = #tpu.dot_dimension_numbers<[1], [0], [0], [1], [0, 0, 1, 1], [], []>} : vector<8x27xbf16>, vector<27x256xbf16>, vector<8x256xf32> -> vector<8x256xf32>
    %11 = arith.maximumf %7, %10 : vector<8x256xf32>
    %c0_13 = arith.constant 0 : index
    %c3 = arith.constant 3 : index
    %c0_14 = arith.constant 0 : index
    %c0_15 = arith.constant 0 : index
    %12 = vector.load %arg3[%c0_13, %c3, %c0_14, %c0_15] : memref<1x4x27x256xbf16, #tpu.memory_space<vmem>>, vector<1x1x27x256xbf16>
    %13 = vector.shape_cast %12 : vector<1x1x27x256xbf16> to vector<27x256xbf16>
    %cst_16 = arith.constant dense<0.000000e+00> : vector<8x256xf32>
    %14 = tpu.matmul %0, %13, %cst_16 {dimension_numbers = #tpu.dot_dimension_numbers<[1], [0], [0], [1], [0, 0, 1, 1], [], []>} : vector<8x27xbf16>, vector<27x256xbf16>, vector<8x256xf32> -> vector<8x256xf32>
    %15 = arith.maximumf %11, %14 : vector<8x256xf32>
    %c0_17 = arith.constant 0 : index
    %c0_18 = arith.constant 0 : index
    %16 = vector.load %arg2[%c0_17, %c0_18] : memref<8x1xf32, #tpu.memory_space<vmem>>, vector<8x1xf32>
    %17 = vector.broadcast %16 : vector<8x1xf32> to vector<8x256xf32>
    %18 = arith.addf %15, %17 : vector<8x256xf32>
    %cst_19 = arith.constant 0.000000e+00 : f32
    %19 = vector.broadcast %cst_19 : f32 to vector<8x256xf32>
    %20 = arith.maximumf %18, %19 : vector<8x256xf32>
    %c0_20 = arith.constant 0 : index
    %c0_21 = arith.constant 0 : index
    %c0_22 = arith.constant 0 : index
    %21 = vector.load %arg4[%c0_20, %c0_21, %c0_22] : memref<1x8x256xf32, #tpu.memory_space<vmem>>, vector<1x8x256xf32>
    %22 = vector.shape_cast %21 : vector<1x8x256xf32> to vector<8x256xf32>
    %23 = vector.shape_cast %20 : vector<8x256xf32> to vector<1x8x256xf32>
    tpu.vector_store %arg4[%c0_20, %c0_21, %c0_22], %23 {strides = array<i32>} : memref<1x8x256xf32, #tpu.memory_space<vmem>>, vector<1x8x256xf32>,
    return
  }
  func.func @transform_0(%arg0: i32) -> (i32, i32) {
    %c0_i32 = arith.constant 0 : i32
    %c0_i32_0 = arith.constant 0 : i32
    %c0_i32_1 = arith.constant 0 : i32
    return %c0_i32, %c0_i32_0 : i32, i32
  }
  func.func @transform_1(%arg0: i32) -> (i32, i32) {
    %c0_i32 = arith.constant 0 : i32
    %c0_i32_0 = arith.constant 0 : i32
    %c0_i32_1 = arith.constant 0 : i32
    return %c0_i32, %c0_i32_0 : i32, i32
  }
  func.func @transform_2(%arg0: i32) -> (i32, i32, i32, i32) {
    %c0_i32 = arith.constant 0 : i32
    %c0_i32_0 = arith.constant 0 : i32
    %c0_i32_1 = arith.constant 0 : i32
    %c0_i32_2 = arith.constant 0 : i32
    return %arg0, %c0_i32, %c0_i32_0, %c0_i32_1 : i32, i32, i32, i32
  }
  func.func @transform_3(%arg0: i32) -> (i32, i32, i32) {
    %c0_i32 = arith.constant 0 : i32
    %c0_i32_0 = arith.constant 0 : i32
    %c0_i32_1 = arith.constant 0 : i32
    return %arg0, %c0_i32, %c0_i32_0 : i32, i32, i32
  }
}

module attributes {stable_mosaic.version = 11 : i64} {
  func.func @_conv_relu_pool_kernel(%arg0: i32, %arg1: memref<16x54xbf16, #tpu.memory_space<vmem>>, %arg2: memref<16x1xf32, #tpu.memory_space<vmem>>, %arg3: memref<1x4x54x128xbf16, #tpu.memory_space<vmem>>, %arg4: memref<1x16x128xf32, #tpu.memory_space<vmem>>) attributes {dimension_semantics = [#tpu.dimension_semantics<parallel>], iteration_bounds = array<i64: 2>, scalar_prefetch = 0 : i64, scratch_operands = 0 : i64, tpu.core_type = #tpu.core_type<tc>, window_params = [{pipeline_mode = #tpu.pipeline_mode<synchronous>, transform_indices = @transform_0, window_bounds = array<i64: 16, 54>}, {pipeline_mode = #tpu.pipeline_mode<synchronous>, transform_indices = @transform_1, window_bounds = array<i64: 16, 1>}, {transform_indices = @transform_2, window_bounds = array<i64: 1, 4, 54, 128>}, {transform_indices = @transform_3, window_bounds = array<i64: 1, 16, 128>}]} {
    %c0 = arith.constant 0 : index
    %c0_0 = arith.constant 0 : index
    %0 = vector.load %arg1[%c0, %c0_0] : memref<16x54xbf16, #tpu.memory_space<vmem>>, vector<16x54xbf16>
    %c0_1 = arith.constant 0 : index
    %c0_2 = arith.constant 0 : index
    %c0_3 = arith.constant 0 : index
    %c0_4 = arith.constant 0 : index
    %1 = vector.load %arg3[%c0_1, %c0_2, %c0_3, %c0_4] : memref<1x4x54x128xbf16, #tpu.memory_space<vmem>>, vector<1x1x54x128xbf16>
    %2 = vector.shape_cast %1 : vector<1x1x54x128xbf16> to vector<54x128xbf16>
    %cst = arith.constant dense<0.000000e+00> : vector<16x128xf32>
    %3 = tpu.matmul %0, %2, %cst {dimension_numbers = #tpu.dot_dimension_numbers<[1], [0], [0], [1], [0, 0, 1, 1], [], []>} : vector<16x54xbf16>, vector<54x128xbf16>, vector<16x128xf32> -> vector<16x128xf32>
    %c0_5 = arith.constant 0 : index
    %c1 = arith.constant 1 : index
    %c0_6 = arith.constant 0 : index
    %c0_7 = arith.constant 0 : index
    %4 = vector.load %arg3[%c0_5, %c1, %c0_6, %c0_7] : memref<1x4x54x128xbf16, #tpu.memory_space<vmem>>, vector<1x1x54x128xbf16>
    %5 = vector.shape_cast %4 : vector<1x1x54x128xbf16> to vector<54x128xbf16>
    %cst_8 = arith.constant dense<0.000000e+00> : vector<16x128xf32>
    %6 = tpu.matmul %0, %5, %cst_8 {dimension_numbers = #tpu.dot_dimension_numbers<[1], [0], [0], [1], [0, 0, 1, 1], [], []>} : vector<16x54xbf16>, vector<54x128xbf16>, vector<16x128xf32> -> vector<16x128xf32>
    %7 = arith.maximumf %3, %6 : vector<16x128xf32>
    %c0_9 = arith.constant 0 : index
    %c2 = arith.constant 2 : index
    %c0_10 = arith.constant 0 : index
    %c0_11 = arith.constant 0 : index
    %8 = vector.load %arg3[%c0_9, %c2, %c0_10, %c0_11] : memref<1x4x54x128xbf16, #tpu.memory_space<vmem>>, vector<1x1x54x128xbf16>
    %9 = vector.shape_cast %8 : vector<1x1x54x128xbf16> to vector<54x128xbf16>
    %cst_12 = arith.constant dense<0.000000e+00> : vector<16x128xf32>
    %10 = tpu.matmul %0, %9, %cst_12 {dimension_numbers = #tpu.dot_dimension_numbers<[1], [0], [0], [1], [0, 0, 1, 1], [], []>} : vector<16x54xbf16>, vector<54x128xbf16>, vector<16x128xf32> -> vector<16x128xf32>
    %11 = arith.maximumf %7, %10 : vector<16x128xf32>
    %c0_13 = arith.constant 0 : index
    %c3 = arith.constant 3 : index
    %c0_14 = arith.constant 0 : index
    %c0_15 = arith.constant 0 : index
    %12 = vector.load %arg3[%c0_13, %c3, %c0_14, %c0_15] : memref<1x4x54x128xbf16, #tpu.memory_space<vmem>>, vector<1x1x54x128xbf16>
    %13 = vector.shape_cast %12 : vector<1x1x54x128xbf16> to vector<54x128xbf16>
    %cst_16 = arith.constant dense<0.000000e+00> : vector<16x128xf32>
    %14 = tpu.matmul %0, %13, %cst_16 {dimension_numbers = #tpu.dot_dimension_numbers<[1], [0], [0], [1], [0, 0, 1, 1], [], []>} : vector<16x54xbf16>, vector<54x128xbf16>, vector<16x128xf32> -> vector<16x128xf32>
    %15 = arith.maximumf %11, %14 : vector<16x128xf32>
    %c0_17 = arith.constant 0 : index
    %c0_18 = arith.constant 0 : index
    %16 = vector.load %arg2[%c0_17, %c0_18] : memref<16x1xf32, #tpu.memory_space<vmem>>, vector<16x1xf32>
    %17 = vector.broadcast %16 : vector<16x1xf32> to vector<16x128xf32>
    %18 = arith.addf %15, %17 : vector<16x128xf32>
    %cst_19 = arith.constant 0.000000e+00 : f32
    %19 = vector.broadcast %cst_19 : f32 to vector<16x128xf32>
    %20 = arith.maximumf %18, %19 : vector<16x128xf32>
    %c0_20 = arith.constant 0 : index
    %c0_21 = arith.constant 0 : index
    %c0_22 = arith.constant 0 : index
    %21 = vector.load %arg4[%c0_20, %c0_21, %c0_22] : memref<1x16x128xf32, #tpu.memory_space<vmem>>, vector<1x16x128xf32>
    %22 = vector.shape_cast %21 : vector<1x16x128xf32> to vector<16x128xf32>
    %23 = vector.shape_cast %20 : vector<16x128xf32> to vector<1x16x128xf32>
    tpu.vector_store %arg4[%c0_20, %c0_21, %c0_22], %23 {strides = array<i32>} : memref<1x16x128xf32, #tpu.memory_space<vmem>>, vector<1x16x128xf32>,
    return
  }
  func.func @transform_0(%arg0: i32) -> (i32, i32) {
    %c0_i32 = arith.constant 0 : i32
    %c0_i32_0 = arith.constant 0 : i32
    %c0_i32_1 = arith.constant 0 : i32
    return %c0_i32, %c0_i32_0 : i32, i32
  }
  func.func @transform_1(%arg0: i32) -> (i32, i32) {
    %c0_i32 = arith.constant 0 : i32
    %c0_i32_0 = arith.constant 0 : i32
    %c0_i32_1 = arith.constant 0 : i32
    return %c0_i32, %c0_i32_0 : i32, i32
  }
  func.func @transform_2(%arg0: i32) -> (i32, i32, i32, i32) {
    %c0_i32 = arith.constant 0 : i32
    %c0_i32_0 = arith.constant 0 : i32
    %c0_i32_1 = arith.constant 0 : i32
    %c0_i32_2 = arith.constant 0 : i32
    return %arg0, %c0_i32, %c0_i32_0, %c0_i32_1 : i32, i32, i32, i32
  }
  func.func @transform_3(%arg0: i32) -> (i32, i32, i32) {
    %c0_i32 = arith.constant 0 : i32
    %c0_i32_0 = arith.constant 0 : i32
    %c0_i32_1 = arith.constant 0 : i32
    return %arg0, %c0_i32, %c0_i32_0 : i32, i32, i32
  }
}

module attributes {stable_mosaic.version = 11 : i64} {
  func.func @_mlp_kernel(%arg0: i32, %arg1: memref<2x640xbf16, #tpu.memory_space<vmem>>, %arg2: memref<640x128xbf16, #tpu.memory_space<vmem>>, %arg3: memref<1x128xf32, #tpu.memory_space<vmem>>, %arg4: memref<128x128xbf16, #tpu.memory_space<vmem>>, %arg5: memref<1x128xf32, #tpu.memory_space<vmem>>, %arg6: memref<128x128xbf16, #tpu.memory_space<vmem>>, %arg7: memref<1x128xf32, #tpu.memory_space<vmem>>, %arg8: memref<2x128xf32, #tpu.memory_space<vmem>>, %arg9: memref<2x128xf32, #tpu.memory_space<vmem>>) attributes {dimension_semantics = [#tpu.dimension_semantics<arbitrary>], iteration_bounds = array<i64: 1>, scalar_prefetch = 0 : i64, scratch_operands = 1 : i64, tpu.core_type = #tpu.core_type<tc>, window_params = [{transform_indices = @transform_0, window_bounds = array<i64: 2, 640>}, {transform_indices = @transform_1, window_bounds = array<i64: 640, 128>}, {pipeline_mode = #tpu.pipeline_mode<synchronous>, transform_indices = @transform_2, window_bounds = array<i64: 1, 128>}, {pipeline_mode = #tpu.pipeline_mode<synchronous>, transform_indices = @transform_3, window_bounds = array<i64: 128, 128>}, {pipeline_mode = #tpu.pipeline_mode<synchronous>, transform_indices = @transform_4, window_bounds = array<i64: 1, 128>}, {pipeline_mode = #tpu.pipeline_mode<synchronous>, transform_indices = @transform_5, window_bounds = array<i64: 128, 128>}, {pipeline_mode = #tpu.pipeline_mode<synchronous>, transform_indices = @transform_6, window_bounds = array<i64: 1, 128>}, {pipeline_mode = #tpu.pipeline_mode<synchronous>, transform_indices = @transform_7, window_bounds = array<i64: 2, 128>}]} {
    %c0_i32 = arith.constant 0 : i32
    %0 = arith.cmpi eq, %arg0, %c0_i32 : i32
    %1 = arith.extui %0 : i1 to i32
    %c0_i32_0 = arith.constant 0 : i32
    %2 = arith.cmpi ne, %1, %c0_i32_0 : i32
    scf.if %2 {
      %cst_10 = arith.constant 0.000000e+00 : f32
      %12 = vector.broadcast %cst_10 : f32 to vector<2x128xf32>
      %c0_11 = arith.constant 0 : index
      %c0_12 = arith.constant 0 : index
      %13 = vector.load %arg9[%c0_11, %c0_12] : memref<2x128xf32, #tpu.memory_space<vmem>>, vector<2x128xf32>
      tpu.vector_store %arg9[%c0_11, %c0_12], %12 {strides = array<i32>} : memref<2x128xf32, #tpu.memory_space<vmem>>, vector<2x128xf32>,
    } else {
    }
    %c0 = arith.constant 0 : index
    %c0_1 = arith.constant 0 : index
    %3 = vector.load %arg9[%c0, %c0_1] : memref<2x128xf32, #tpu.memory_space<vmem>>, vector<2x128xf32>
    %c0_2 = arith.constant 0 : index
    %c0_3 = arith.constant 0 : index
    %4 = vector.load %arg1[%c0_2, %c0_3] : memref<2x640xbf16, #tpu.memory_space<vmem>>, vector<2x640xbf16>
    %c0_4 = arith.constant 0 : index
    %c0_5 = arith.constant 0 : index
    %5 = vector.load %arg2[%c0_4, %c0_5] : memref<640x128xbf16, #tpu.memory_space<vmem>>, vector<640x128xbf16>
    %cst = arith.constant dense<0.000000e+00> : vector<2x128xf32>
    %6 = tpu.matmul %4, %5, %cst {dimension_numbers = #tpu.dot_dimension_numbers<[1], [0], [0], [1], [0, 0, 1, 1], [], []>} : vector<2x640xbf16>, vector<640x128xbf16>, vector<2x128xf32> -> vector<2x128xf32>
    %7 = arith.addf %3, %6 : vector<2x128xf32>
    %c0_6 = arith.constant 0 : index
    %c0_7 = arith.constant 0 : index
    %8 = vector.load %arg9[%c0_6, %c0_7] : memref<2x128xf32, #tpu.memory_space<vmem>>, vector<2x128xf32>
    tpu.vector_store %arg9[%c0_6, %c0_7], %7 {strides = array<i32>} : memref<2x128xf32, #tpu.memory_space<vmem>>, vector<2x128xf32>,
    %c0_i32_8 = arith.constant 0 : i32
    %9 = arith.cmpi eq, %arg0, %c0_i32_8 : i32
    %10 = arith.extui %9 : i1 to i32
    %c0_i32_9 = arith.constant 0 : i32
    %11 = arith.cmpi ne, %10, %c0_i32_9 : i32
    scf.if %11 {
      %c0_10 = arith.constant 0 : index
      %c0_11 = arith.constant 0 : index
      %12 = vector.load %arg9[%c0_10, %c0_11] : memref<2x128xf32, #tpu.memory_space<vmem>>, vector<2x128xf32>
      %c0_12 = arith.constant 0 : index
      %c0_13 = arith.constant 0 : index
      %13 = vector.load %arg3[%c0_12, %c0_13] : memref<1x128xf32, #tpu.memory_space<vmem>>, vector<1x128xf32>
      %14 = vector.broadcast %13 : vector<1x128xf32> to vector<2x128xf32>
      %15 = arith.addf %12, %14 : vector<2x128xf32>
      %cst_14 = arith.constant 0.000000e+00 : f32
      %16 = vector.broadcast %cst_14 : f32 to vector<2x128xf32>
      %17 = arith.maximumf %15, %16 : vector<2x128xf32>
      %18 = arith.truncf %17 : vector<2x128xf32> to vector<2x128xbf16>
      %c0_15 = arith.constant 0 : index
      %c0_16 = arith.constant 0 : index
      %19 = vector.load %arg4[%c0_15, %c0_16] : memref<128x128xbf16, #tpu.memory_space<vmem>>, vector<128x128xbf16>
      %cst_17 = arith.constant dense<0.000000e+00> : vector<2x128xf32>
      %20 = tpu.matmul %18, %19, %cst_17 {dimension_numbers = #tpu.dot_dimension_numbers<[1], [0], [0], [1], [0, 0, 1, 1], [], []>} : vector<2x128xbf16>, vector<128x128xbf16>, vector<2x128xf32> -> vector<2x128xf32>
      %c0_18 = arith.constant 0 : index
      %c0_19 = arith.constant 0 : index
      %21 = vector.load %arg5[%c0_18, %c0_19] : memref<1x128xf32, #tpu.memory_space<vmem>>, vector<1x128xf32>
      %22 = vector.broadcast %21 : vector<1x128xf32> to vector<2x128xf32>
      %23 = arith.addf %20, %22 : vector<2x128xf32>
      %cst_20 = arith.constant 0.000000e+00 : f32
      %24 = vector.broadcast %cst_20 : f32 to vector<2x128xf32>
      %25 = arith.maximumf %23, %24 : vector<2x128xf32>
      %26 = arith.truncf %25 : vector<2x128xf32> to vector<2x128xbf16>
      %c0_21 = arith.constant 0 : index
      %c0_22 = arith.constant 0 : index
      %27 = vector.load %arg6[%c0_21, %c0_22] : memref<128x128xbf16, #tpu.memory_space<vmem>>, vector<128x128xbf16>
      %cst_23 = arith.constant dense<0.000000e+00> : vector<2x128xf32>
      %28 = tpu.matmul %26, %27, %cst_23 {dimension_numbers = #tpu.dot_dimension_numbers<[1], [0], [0], [1], [0, 0, 1, 1], [], []>} : vector<2x128xbf16>, vector<128x128xbf16>, vector<2x128xf32> -> vector<2x128xf32>
      %c0_24 = arith.constant 0 : index
      %c0_25 = arith.constant 0 : index
      %29 = vector.load %arg7[%c0_24, %c0_25] : memref<1x128xf32, #tpu.memory_space<vmem>>, vector<1x128xf32>
      %30 = vector.broadcast %29 : vector<1x128xf32> to vector<2x128xf32>
      %31 = arith.addf %28, %30 : vector<2x128xf32>
      %c0_26 = arith.constant 0 : index
      %c0_27 = arith.constant 0 : index
      %32 = vector.load %arg8[%c0_26, %c0_27] : memref<2x128xf32, #tpu.memory_space<vmem>>, vector<2x128xf32>
      tpu.vector_store %arg8[%c0_26, %c0_27], %31 {strides = array<i32>} : memref<2x128xf32, #tpu.memory_space<vmem>>, vector<2x128xf32>,
    } else {
    }
    return
  }
  func.func @transform_0(%arg0: i32) -> (i32, i32) {
    %c0_i32 = arith.constant 0 : i32
    %c0_i32_0 = arith.constant 0 : i32
    return %c0_i32, %arg0 : i32, i32
  }
  func.func @transform_1(%arg0: i32) -> (i32, i32) {
    %c0_i32 = arith.constant 0 : i32
    %c0_i32_0 = arith.constant 0 : i32
    return %arg0, %c0_i32 : i32, i32
  }
  func.func @transform_2(%arg0: i32) -> (i32, i32) {
    %c0_i32 = arith.constant 0 : i32
    %c0_i32_0 = arith.constant 0 : i32
    %c0_i32_1 = arith.constant 0 : i32
    return %c0_i32, %c0_i32_0 : i32, i32
  }
  func.func @transform_3(%arg0: i32) -> (i32, i32) {
    %c0_i32 = arith.constant 0 : i32
    %c0_i32_0 = arith.constant 0 : i32
    %c0_i32_1 = arith.constant 0 : i32
    return %c0_i32, %c0_i32_0 : i32, i32
  }
  func.func @transform_4(%arg0: i32) -> (i32, i32) {
    %c0_i32 = arith.constant 0 : i32
    %c0_i32_0 = arith.constant 0 : i32
    %c0_i32_1 = arith.constant 0 : i32
    return %c0_i32, %c0_i32_0 : i32, i32
  }
  func.func @transform_5(%arg0: i32) -> (i32, i32) {
    %c0_i32 = arith.constant 0 : i32
    %c0_i32_0 = arith.constant 0 : i32
    %c0_i32_1 = arith.constant 0 : i32
    return %c0_i32, %c0_i32_0 : i32, i32
  }
  func.func @transform_6(%arg0: i32) -> (i32, i32) {
    %c0_i32 = arith.constant 0 : i32
    %c0_i32_0 = arith.constant 0 : i32
    %c0_i32_1 = arith.constant 0 : i32
    return %c0_i32, %c0_i32_0 : i32, i32
  }
  func.func @transform_7(%arg0: i32) -> (i32, i32) {
    %c0_i32 = arith.constant 0 : i32
    %c0_i32_0 = arith.constant 0 : i32
    %c0_i32_1 = arith.constant 0 : i32
    return %c0_i32, %c0_i32_0 : i32, i32
  }
}

</mosaic_0001>

<llo_original>
// kernel: conv3_forward.3
$region0: #{conv3_forward.3}
  #allocation0 [shape = 'u32[]', space=smem, size = 0x4, offset = 0x4, fixed_abs, tag = 'smem constant byte address 0x4 - core index']
  #allocation1 [shape = 'u32[72,128]{1,0:T(1,128)}', space=vmem, size = 0x9000, scoped, tag = 'internal scratch']
  %s0 = inlined_call_operand.vmem [shape: bf16[8,27], index: 0, kind: input, shape index: {}]
  %s1 = inlined_call_operand.vmem [shape: f32[8,1], index: 1, kind: input, shape index: {}]
  %s2 = inlined_call_operand.vmem [shape: bf16[2,4,27,256], index: 2, kind: input, shape index: {}]
  %s3 = inlined_call_operand.vmem [shape: f32[2,8,256], index: 3, kind: output, shape index: {}]
  %s4 = sld [smem:[#allocation0]]
  $region45: #{conv3_forward.3} parent=0
    _
  %s6 = ssub.s32 1, %s4
  %s7 = scalar_select 0, %s6, %s4
  loop: start=0, step=1, limit=4
  $region2: #{conv3_forward.3} parent=0 // loop_pre_header
    _
  $region3: #{conv3_forward.3} parent=0 // loop_header
    %s9 = sphi 0, %s13
    %p10 = scmp.ge.s32.totalorder %s9, 4
    %s17 = sphi 0, %s17
    %s19 = sphi 0, %s17
    %s20 = sphi 0, %s19
    %s34 = sphi 0, %s20
    %s38 = sphi 0, %s38
    %s40 = sphi 0, %s38
    %s41 = sphi 0, %s40
    %s55 = sphi 0, %s41
    %s61 = sphi 0, %s63
    %s64 = sphi 0, %s61
    %s65 = sphi 0, %s64
    %s81 = sphi 0, %s65
    %s87 = sphi 0, %s89
    %s90 = sphi 0, %s87
    %s91 = sphi 0, %s90
    %s107 = sphi 0, %s91
  $region4: #{conv3_forward.3} parent=0 // loop_header_branch
    %12 = sbr.rel (%p10) target = $region8
  $region5: #{conv3_forward.3} parent=0 // loop_body
    %s14 = ssub.s32 %s9, 1
    %s15 = ssub.s32 %s9, 2
    %s16 = sadd.s32 %s9, 1
    %s18 = sadd.s32 %s17, 1
    %p21 = scmp.eq.s32.totalorder %s9, 1
    %p22 = scmp.ne.s32.totalorder %s17, %s19
    %p23 = scmp.eq.s32.totalorder %s9, 0
    %p24 = por %p22, %p23
    %p25 = scmp.ne.s32.totalorder %s17, %s19
    %p26 = scmp.eq.s32.totalorder %s14, 1
    %p27 = por %p25, %p26
    %p28 = scmp.ne.s32.totalorder %s19, %s20
    %p29 = scmp.eq.s32.totalorder %s14, 0
    %p30 = por %p28, %p29
    %p31 = scmp.ne.s32.totalorder %s19, %s20
    %p32 = scmp.eq.s32.totalorder %s15, 1
    %p33 = por %p31, %p32
    %p35 = scmp.ne.s32.totalorder %s20, %s34
    %p36 = scmp.eq.s32.totalorder %s15, 0
    %p37 = por %p35, %p36
    %s39 = sadd.s32 %s38, 1
    %p42 = scmp.eq.s32.totalorder %s9, 1
    %p43 = scmp.ne.s32.totalorder %s38, %s40
    %p44 = scmp.eq.s32.totalorder %s9, 0
    %p45 = por %p43, %p44
    %p46 = scmp.ne.s32.totalorder %s38, %s40
    %p47 = scmp.eq.s32.totalorder %s14, 1
    %p48 = por %p46, %p47
    %p49 = scmp.ne.s32.totalorder %s40, %s41
    %p50 = scmp.eq.s32.totalorder %s14, 0
    %p51 = por %p49, %p50
    %p52 = scmp.ne.s32.totalorder %s40, %s41
    %p53 = scmp.eq.s32.totalorder %s15, 1
    %p54 = por %p52, %p53
    %p56 = scmp.ne.s32.totalorder %s41, %s55
    %p57 = scmp.eq.s32.totalorder %s15, 0
    %p58 = por %p56, %p57
    %s59 = ssub.s32 %s9, %s16
    %p60 = scmp.eq.s32.totalorder %s59, 0
    %s62 = sadd.s32 %s61, 1
    %s63 = scalar_select %p60, %s61, %s62
    %p66 = pneg %p60
    %p67 = scmp.eq.s32.totalorder %s9, 1
    %p68 = por %p66, %p67
    %p69 = scmp.ne.s32.totalorder %s61, %s64
    %p70 = scmp.eq.s32.totalorder %s9, 0
    %p71 = por %p69, %p70
    %p72 = scmp.ne.s32.totalorder %s61, %s64
    %p73 = scmp.eq.s32.totalorder %s14, 1
    %p74 = por %p72, %p73
    %p75 = scmp.ne.s32.totalorder %s64, %s65
    %p76 = scmp.eq.s32.totalorder %s14, 0
    %p77 = por %p75, %p76
    %p78 = scmp.ne.s32.totalorder %s64, %s65
    %p79 = scmp.eq.s32.totalorder %s15, 1
    %p80 = por %p78, %p79
    %p82 = scmp.ne.s32.totalorder %s65, %s81
    %p83 = scmp.eq.s32.totalorder %s15, 0
    %p84 = por %p82, %p83
    %s85 = ssub.s32 %s9, %s16
    %p86 = scmp.eq.s32.totalorder %s85, 0
    %s88 = sadd.s32 %s87, 1
    %s89 = scalar_select %p86, %s87, %s88
    %p92 = pneg %p86
    %p93 = scmp.eq.s32.totalorder %s9, 1
    %p94 = por %p92, %p93
    %p95 = scmp.ne.s32.totalorder %s87, %s90
    %p96 = scmp.eq.s32.totalorder %s9, 0
    %p97 = por %p95, %p96
    %p98 = scmp.ne.s32.totalorder %s87, %s90
    %p99 = scmp.eq.s32.totalorder %s14, 1
    %p100 = por %p98, %p99
    %p101 = scmp.ne.s32.totalorder %s90, %s91
    %p102 = scmp.eq.s32.totalorder %s14, 0
    %p103 = por %p101, %p102
    %p104 = scmp.ne.s32.totalorder %s90, %s91
    %p105 = scmp.eq.s32.totalorder %s15, 1
    %p106 = por %p104, %p105
    %p108 = scmp.ne.s32.totalorder %s91, %s107
    %p109 = scmp.eq.s32.totalorder %s15, 0
    %p110 = por %p108, %p109
    %p111 = scmp.le.s32.totalorder 1, %s9
    %p112 = scmp.lt.s32.totalorder %s9, 3
    %p113 = pnand %p111, %p112
    %p114 = pneg %p113
    // Predicated region
    $region9: #{conv3_forward.3} parent=5 // pred_check
      _
    $region10: #{conv3_forward.3} parent=5 // pred_check_branch
      %116 = sbr.rel (%p113) target = $region12
    $region11: #{conv3_forward.3} parent=5 // pred_region
      %s117 = ssub.s32 %s9, 1
      // Predicated region
      $region13: #{conv3_forward.3} parent=11 // pred_check
        %p118 = pneg %p30
      $region14: #{conv3_forward.3} parent=11 // pred_check_branch
        %120 = sbr.rel (%p118) target = $region16
      $region15: #{conv3_forward.3} parent=11 // pred_region
        _
      $region16: #{conv3_forward.3} parent=11 // pred_fallthru
        _
      // Predicated region
      $region17: #{conv3_forward.3} parent=11 // pred_check
        %p121 = pneg %p51
      $region18: #{conv3_forward.3} parent=11 // pred_check_branch
        %123 = sbr.rel (%p121) target = $region20
      $region19: #{conv3_forward.3} parent=11 // pred_region
        _
      $region20: #{conv3_forward.3} parent=11 // pred_fallthru
        _
    $region12: #{conv3_forward.3} parent=5 // pred_fallthru
      _
    %p124 = scmp.lt.s32.totalorder %s9, 2
    // Predicated region
    $region21: #{conv3_forward.3} parent=5 // pred_check
      %p125 = pneg %p124
    $region22: #{conv3_forward.3} parent=5 // pred_check_branch
      %127 = sbr.rel (%p125) target = $region24
    $region23: #{conv3_forward.3} parent=5 // pred_region
      // Predicated region
      $region25: #{conv3_forward.3} parent=23 // pred_check
        %p128 = pneg %p71
      $region26: #{conv3_forward.3} parent=23 // pred_check_branch
        %130 = sbr.rel (%p128) target = $region28
      $region27: #{conv3_forward.3} parent=23 // pred_region
        %p131 = scmp.lt.s32.totalorder %s9, 1
        %s132 = scalar_select %p131, %s9, 1
        %s133 = smul.addr %s132, 32
        %s134 = smul.addr %s133, 4
        %s135 = scalar_lea.vmem %s2, %s134
      $region28: #{conv3_forward.3} parent=23 // pred_fallthru
        _
    $region24: #{conv3_forward.3} parent=5 // pred_fallthru
      _
    %p136 = scmp.le.s32.totalorder 1, %s9
    %p137 = scmp.lt.s32.totalorder %s9, 3
    %p138 = pnand %p136, %p137
    %p139 = pneg %p138
    // Predicated region
    $region29: #{conv3_forward.3} parent=5 // pred_check
      _
    $region30: #{conv3_forward.3} parent=5 // pred_check_branch
      %141 = sbr.rel (%p138) target = $region32
    $region31: #{conv3_forward.3} parent=5 // pred_region
      %s142 = ssub.s32 %s9, 1
      %p143 = pneg %p30
      %p144 = pneg %p27
      %p145 = pneg %p51
      %p146 = pneg %p48
      %p147 = scmp.lt.s32.totalorder %s14, 1
      %s148 = scalar_select %p147, %s14, 1
      %s149 = smul.addr %s148, 32
      %s150 = smul.addr %s149, 4
      %s151 = scalar_lea.vmem %s2, %s150
      %p152 = pneg %p77
      %p153 = pneg %p74
      %p154 = pneg %p103
      %p155 = pneg %p100
      %p156 = scmp.lt.s32.totalorder %s14, 1
      %s157 = scalar_select %p156, %s14, 1
      %s158 = smul.addr %s157, 2
      %s159 = smul.addr %s158, 8
      %s160 = scalar_lea.vmem %s3, %s159
      %p161 = scmp.lt.s32.totalorder %s14, 1
      %s162 = scalar_select %p161, %s14, 1
      %s163 = smul.addr %s162, 32
      %s164 = smul.addr %s163, 4
      %s165 = scalar_lea.vmem %s2, %s164
      %p166 = scmp.lt.s32.totalorder %s14, 1
      %s167 = scalar_select %p166, %s14, 1
      %s168 = smul.addr %s167, 2
      %s169 = smul.addr %s168, 8
      %s170 = scalar_lea.vmem %s3, %s169
      %v172 = vld [vmem:[%s0] sm:$0xf]
      %v173 = vld [vmem:[%s165] sm:$0xff]
      %v174 = vld [vmem:[%s165 + $0x8] sm:$0xff]
      %v175 = vld [vmem:[%s165 + $0x10] sm:$0xff]
      %v176 = vld [vmem:[%s165 + $0x18] sm:$0x33]
      %v181 = vunpack.c.l.b16 %v173
      %v182 = vunpack.c.h.b16 %v173
      %v183 = vunpack.c.l.b16 %v174
      %v184 = vunpack.c.h.b16 %v174
      %v185 = vunpack.c.l.b16 %v175
      %v186 = vunpack.c.h.b16 %v175
      %v187 = vunpack.c.l.b16 %v176
      %v188 = vunpack.c.h.b16 %v176
      %v189 = vpack.c.b16 %v183, %v181
      %v190 = vpack.c.b16 %v184, %v182
      %v191 = vpack.c.b16 %v187, %v185
      %v192 = vpack.c.b16 %v188, %v186
      %vm195 = vcmask 220160
      %v197 = vsel %vm195, %v172, 0
      %vm199 = vcmask 1044480
      %vm200 = vcmask 1045504
      %v201 = vsel %vm199, 4294967295, 65535
      %v202 = vsel %vm200, %v201, 0
      %v204 = vand.u32 %v191, %v202
      %v207 = vand.u32 %v192, %v202
      %209 = vmatpush.bf16.msra.mxu0 0
      %210 = vmatpush.bf16.msra.mxu0 0
      %211 = vmatpush.bf16.msra.mxu0 0
      %212 = vmatpush.bf16.msra.mxu0 0
      %213 = vmatpush.bf16.msra.mxu0 0
      %214 = vmatpush.bf16.msra.mxu0 0
      %215 = vmatpush.bf16.msra.mxu0 %v204
      %216 = vmatpush.bf16.msra.mxu0 %v189
      %217 = vmatmul.bf16.gmra.mxu0 %v197
      %v218 = vpop.f32.mrf.mxu0
      %v219 = vadd.f32 0.0, %v218
      %v220 = vpop.f32.mrf.mxu0
      %221 = vdwg.mxu0
      %222 = vmatpush.bf16.msra.mxu0 0
      %223 = vmatpush.bf16.msra.mxu0 0
      %224 = vmatpush.bf16.msra.mxu0 0
      %225 = vmatpush.bf16.msra.mxu0 0
      %226 = vmatpush.bf16.msra.mxu0 0
      %227 = vmatpush.bf16.msra.mxu0 0
      %228 = vmatpush.bf16.msra.mxu0 %v207
      %229 = vmatpush.bf16.msra.mxu0 %v190
      %230 = vmatmul.bf16.gmra.mxu0 %v197
      %v231 = vpop.f32.mrf.mxu0
      %v232 = vadd.f32 0.0, %v231
      %v233 = vpop.f32.mrf.mxu0
      %234 = vdwg.mxu0
      %s235 = scalar_lea.vmem %s165, 32
      %v236 = vld [vmem:[%s235] sm:$0xff]
      %v237 = vld [vmem:[%s235 + $0x8] sm:$0xff]
      %v238 = vld [vmem:[%s235 + $0x10] sm:$0xff]
      %v239 = vld [vmem:[%s235 + $0x18] sm:$0x33]
      %v244 = vunpack.c.l.b16 %v236
      %v245 = vunpack.c.h.b16 %v236
      %v246 = vunpack.c.l.b16 %v237
      %v247 = vunpack.c.h.b16 %v237
      %v248 = vunpack.c.l.b16 %v238
      %v249 = vunpack.c.h.b16 %v238
      %v250 = vunpack.c.l.b16 %v239
      %v251 = vunpack.c.h.b16 %v239
      %v252 = vpack.c.b16 %v246, %v244
      %v253 = vpack.c.b16 %v247, %v245
      %v254 = vpack.c.b16 %v250, %v248
      %v255 = vpack.c.b16 %v251, %v249
      %v259 = vand.u32 %v254, %v202
      %v262 = vand.u32 %v255, %v202
      %264 = vmatpush.bf16.msra.mxu0 0
      %265 = vmatpush.bf16.msra.mxu0 0
      %266 = vmatpush.bf16.msra.mxu0 0
      %267 = vmatpush.bf16.msra.mxu0 0
      %268 = vmatpush.bf16.msra.mxu0 0
      %269 = vmatpush.bf16.msra.mxu0 0
      %270 = vmatpush.bf16.msra.mxu0 %v259
      %271 = vmatpush.bf16.msra.mxu0 %v252
      %272 = vmatmul.bf16.gmra.mxu0 %v197
      %v273 = vpop.f32.mrf.mxu0
      %v274 = vadd.f32 0.0, %v273
      %v275 = vpop.f32.mrf.mxu0
      %276 = vdwg.mxu0
      %277 = vmatpush.bf16.msra.mxu0 0
      %278 = vmatpush.bf16.msra.mxu0 0
      %279 = vmatpush.bf16.msra.mxu0 0
      %280 = vmatpush.bf16.msra.mxu0 0
      %281 = vmatpush.bf16.msra.mxu0 0
      %282 = vmatpush.bf16.msra.mxu0 0
      %283 = vmatpush.bf16.msra.mxu0 %v262
      %284 = vmatpush.bf16.msra.mxu0 %v253
      %285 = vmatmul.bf16.gmra.mxu0 %v197
      %v286 = vpop.f32.mrf.mxu0
      %v287 = vadd.f32 0.0, %v286
      %v288 = vpop.f32.mrf.mxu0
      %289 = vdwg.mxu0
      %v290 = vmax.f32 %v219, %v274
      %v291 = vmax.f32 %v232, %v287
      %s292 = scalar_lea.vmem %s165, 64
      %v293 = vld [vmem:[%s292] sm:$0xff]
      %v294 = vld [vmem:[%s292 + $0x8] sm:$0xff]
      %v295 = vld [vmem:[%s292 + $0x10] sm:$0xff]
      %v296 = vld [vmem:[%s292 + $0x18] sm:$0x33]
      %v301 = vunpack.c.l.b16 %v293
      %v302 = vunpack.c.h.b16 %v293
      %v303 = vunpack.c.l.b16 %v294
      %v304 = vunpack.c.h.b16 %v294
      %v305 = vunpack.c.l.b16 %v295
      %v306 = vunpack.c.h.b16 %v295
      %v307 = vunpack.c.l.b16 %v296
      %v308 = vunpack.c.h.b16 %v296
      %v309 = vpack.c.b16 %v303, %v301
      %v310 = vpack.c.b16 %v304, %v302
      %v311 = vpack.c.b16 %v307, %v305
      %v312 = vpack.c.b16 %v308, %v306
      %v316 = vand.u32 %v311, %v202
      %v319 = vand.u32 %v312, %v202
      %321 = vmatpush.bf16.msra.mxu0 0
      %322 = vmatpush.bf16.msra.mxu0 0
      %323 = vmatpush.bf16.msra.mxu0 0
      %324 = vmatpush.bf16.msra.mxu0 0
      %325 = vmatpush.bf16.msra.mxu0 0
      %326 = vmatpush.bf16.msra.mxu0 0
      %327 = vmatpush.bf16.msra.mxu0 %v316
      %328 = vmatpush.bf16.msra.mxu0 %v309
      %329 = vmatmul.bf16.gmra.mxu0 %v197
      %v330 = vpop.f32.mrf.mxu0
      %v331 = vadd.f32 0.0, %v330
      %v332 = vpop.f32.mrf.mxu0
      %333 = vdwg.mxu0
      %334 = vmatpush.bf16.msra.mxu0 0
      %335 = vmatpush.bf16.msra.mxu0 0
      %336 = vmatpush.bf16.msra.mxu0 0
      %337 = vmatpush.bf16.msra.mxu0 0
      %338 = vmatpush.bf16.msra.mxu0 0
      %339 = vmatpush.bf16.msra.mxu0 0
      %340 = vmatpush.bf16.msra.mxu0 %v319
      %341 = vmatpush.bf16.msra.mxu0 %v310
      %342 = vmatmul.bf16.gmra.mxu0 %v197
      %v343 = vpop.f32.mrf.mxu0
      %v344 = vadd.f32 0.0, %v343
      %v345 = vpop.f32.mrf.mxu0
      %346 = vdwg.mxu0
      %v347 = vmax.f32 %v290, %v331
      %v348 = vmax.f32 %v291, %v344
      %s349 = scalar_lea.vmem %s165, 96
      %v350 = vld [vmem:[%s349] sm:$0xff]
      %v351 = vld [vmem:[%s349 + $0x8] sm:$0xff]
      %v352 = vld [vmem:[%s349 + $0x10] sm:$0xff]
      %v353 = vld [vmem:[%s349 + $0x18] sm:$0x33]
      %v358 = vunpack.c.l.b16 %v350
      %v359 = vunpack.c.h.b16 %v350
      %v360 = vunpack.c.l.b16 %v351
      %v361 = vunpack.c.h.b16 %v351
      %v362 = vunpack.c.l.b16 %v352
      %v363 = vunpack.c.h.b16 %v352
      %v364 = vunpack.c.l.b16 %v353
      %v365 = vunpack.c.h.b16 %v353
      %v366 = vpack.c.b16 %v360, %v358
      %v367 = vpack.c.b16 %v361, %v359
      %v368 = vpack.c.b16 %v364, %v362
      %v369 = vpack.c.b16 %v365, %v363
      %v373 = vand.u32 %v368, %v202
      %v376 = vand.u32 %v369, %v202
      %378 = vmatpush.bf16.msra.mxu0 0
      %379 = vmatpush.bf16.msra.mxu0 0
      %380 = vmatpush.bf16.msra.mxu0 0
      %381 = vmatpush.bf16.msra.mxu0 0
      %382 = vmatpush.bf16.msra.mxu0 0
      %383 = vmatpush.bf16.msra.mxu0 0
      %384 = vmatpush.bf16.msra.mxu0 %v373
      %385 = vmatpush.bf16.msra.mxu0 %v366
      %386 = vmatmul.bf16.gmra.mxu0 %v197
      %v387 = vpop.f32.mrf.mxu0
      %v388 = vadd.f32 0.0, %v387
      %v389 = vpop.f32.mrf.mxu0
      %390 = vdwg.mxu0
      %391 = vmatpush.bf16.msra.mxu0 0
      %392 = vmatpush.bf16.msra.mxu0 0
      %393 = vmatpush.bf16.msra.mxu0 0
      %394 = vmatpush.bf16.msra.mxu0 0
      %395 = vmatpush.bf16.msra.mxu0 0
      %396 = vmatpush.bf16.msra.mxu0 0
      %397 = vmatpush.bf16.msra.mxu0 %v376
      %398 = vmatpush.bf16.msra.mxu0 %v367
      %399 = vmatmul.bf16.gmra.mxu0 %v197
      %v400 = vpop.f32.mrf.mxu0
      %v401 = vadd.f32 0.0, %v400
      %v402 = vpop.f32.mrf.mxu0
      %403 = vdwg.mxu0
      %v404 = vmax.f32 %v347, %v388
      %v405 = vmax.f32 %v348, %v401
      %v406 = vld [vmem:[%s1] sm:$0xff]
      %408 = vset.pattern.permute.xlu0 0
      %409 = vperm.xlu0 %408, %v406
      %v410 = vpop.permute.xlu0 %409
      %v412 = vadd.f32 %v404, %v410
      %v413 = vadd.f32 %v405, %v410
      %v414 = vmax.f32 %v412, 0.0
      %v415 = vmax.f32 %v413, 0.0
      %416 = vst [vmem:[%s170] sm:$0xff] %v414
      %417 = vst [vmem:[%s170 + $0x8] sm:$0xff] %v415
      %p418 = scmp.lt.s32.totalorder %s14, 1
      %s419 = scalar_select %p418, %s14, 1
      %s420 = smul.addr %s419, 2
      %s421 = smul.addr %s420, 8
      %s422 = scalar_lea.vmem %s3, %s421
      // Predicated region
      $region33: #{conv3_forward.3} parent=31 // pred_check
        %p423 = pneg %p100
      $region34: #{conv3_forward.3} parent=31 // pred_check_branch
        %425 = sbr.rel (%p423) target = $region36
      $region35: #{conv3_forward.3} parent=31 // pred_region
        _
      $region36: #{conv3_forward.3} parent=31 // pred_fallthru
        _
    $region32: #{conv3_forward.3} parent=5 // pred_fallthru
      _
    %p426 = scmp.le.s32.totalorder 2, %s9
    // Predicated region
    $region37: #{conv3_forward.3} parent=5 // pred_check
      %p427 = pneg %p426
    $region38: #{conv3_forward.3} parent=5 // pred_check_branch
      %429 = sbr.rel (%p427) target = $region40
    $region39: #{conv3_forward.3} parent=5 // pred_region
      %s430 = ssub.s32 %s9, 2
      // Predicated region
      $region41: #{conv3_forward.3} parent=39 // pred_check
        %p431 = pneg %p106
      $region42: #{conv3_forward.3} parent=39 // pred_check_branch
        %433 = sbr.rel (%p431) target = $region44
      $region43: #{conv3_forward.3} parent=39 // pred_region
        %p434 = scmp.lt.s32.totalorder %s15, 1
        %s435 = scalar_select %p434, %s15, 1
        %s436 = smul.addr %s435, 2
        %s437 = smul.addr %s436, 8
        %s438 = scalar_lea.vmem %s3, %s437
      $region44: #{conv3_forward.3} parent=39 // pred_fallthru
        _
    $region40: #{conv3_forward.3} parent=5 // pred_fallthru
      _
  $region6: #{conv3_forward.3} parent=0 // loop_footer
    %s13 = sadd.s32 1, %s9
  $region7: #{conv3_forward.3} parent=0 // loop_footer_branch
    %8 = sbr.rel target = $region3
  $region8: #{conv3_forward.3} parent=0 // loop_exit
    _

// kernel: conv3_forward.4
$region0: #{conv3_forward.4}
  #allocation0 [shape = 'u32[]', space=smem, size = 0x4, offset = 0x4, fixed_abs, tag = 'smem constant byte address 0x4 - core index']
  #allocation1 [shape = 'u32[72,128]{1,0:T(1,128)}', space=vmem, size = 0x9000, scoped, tag = 'internal scratch']
  %s0 = inlined_call_operand.vmem [shape: bf16[16,54], index: 0, kind: input, shape index: {}]
  %s1 = inlined_call_operand.vmem [shape: f32[16,1], index: 1, kind: input, shape index: {}]
  %s2 = inlined_call_operand.vmem [shape: bf16[2,4,54,128], index: 2, kind: input, shape index: {}]
  %s3 = inlined_call_operand.vmem [shape: f32[2,16,128], index: 3, kind: output, shape index: {}]
  %s4 = sld [smem:[#allocation0]]
  $region45: #{conv3_forward.4} parent=0
    _
  %s6 = ssub.s32 1, %s4
  %s7 = scalar_select 0, %s6, %s4
  loop: start=0, step=1, limit=4
  $region2: #{conv3_forward.4} parent=0 // loop_pre_header
    _
  $region3: #{conv3_forward.4} parent=0 // loop_header
    %s9 = sphi 0, %s13
    %p10 = scmp.ge.s32.totalorder %s9, 4
    %s17 = sphi 0, %s17
    %s19 = sphi 0, %s17
    %s20 = sphi 0, %s19
    %s34 = sphi 0, %s20
    %s38 = sphi 0, %s38
    %s40 = sphi 0, %s38
    %s41 = sphi 0, %s40
    %s55 = sphi 0, %s41
    %s61 = sphi 0, %s63
    %s64 = sphi 0, %s61
    %s65 = sphi 0, %s64
    %s81 = sphi 0, %s65
    %s87 = sphi 0, %s89
    %s90 = sphi 0, %s87
    %s91 = sphi 0, %s90
    %s107 = sphi 0, %s91
  $region4: #{conv3_forward.4} parent=0 // loop_header_branch
    %12 = sbr.rel (%p10) target = $region8
  $region5: #{conv3_forward.4} parent=0 // loop_body
    %s14 = ssub.s32 %s9, 1
    %s15 = ssub.s32 %s9, 2
    %s16 = sadd.s32 %s9, 1
    %s18 = sadd.s32 %s17, 1
    %p21 = scmp.eq.s32.totalorder %s9, 1
    %p22 = scmp.ne.s32.totalorder %s17, %s19
    %p23 = scmp.eq.s32.totalorder %s9, 0
    %p24 = por %p22, %p23
    %p25 = scmp.ne.s32.totalorder %s17, %s19
    %p26 = scmp.eq.s32.totalorder %s14, 1
    %p27 = por %p25, %p26
    %p28 = scmp.ne.s32.totalorder %s19, %s20
    %p29 = scmp.eq.s32.totalorder %s14, 0
    %p30 = por %p28, %p29
    %p31 = scmp.ne.s32.totalorder %s19, %s20
    %p32 = scmp.eq.s32.totalorder %s15, 1
    %p33 = por %p31, %p32
    %p35 = scmp.ne.s32.totalorder %s20, %s34
    %p36 = scmp.eq.s32.totalorder %s15, 0
    %p37 = por %p35, %p36
    %s39 = sadd.s32 %s38, 1
    %p42 = scmp.eq.s32.totalorder %s9, 1
    %p43 = scmp.ne.s32.totalorder %s38, %s40
    %p44 = scmp.eq.s32.totalorder %s9, 0
    %p45 = por %p43, %p44
    %p46 = scmp.ne.s32.totalorder %s38, %s40
    %p47 = scmp.eq.s32.totalorder %s14, 1
    %p48 = por %p46, %p47
    %p49 = scmp.ne.s32.totalorder %s40, %s41
    %p50 = scmp.eq.s32.totalorder %s14, 0
    %p51 = por %p49, %p50
    %p52 = scmp.ne.s32.totalorder %s40, %s41
    %p53 = scmp.eq.s32.totalorder %s15, 1
    %p54 = por %p52, %p53
    %p56 = scmp.ne.s32.totalorder %s41, %s55
    %p57 = scmp.eq.s32.totalorder %s15, 0
    %p58 = por %p56, %p57
    %s59 = ssub.s32 %s9, %s16
    %p60 = scmp.eq.s32.totalorder %s59, 0
    %s62 = sadd.s32 %s61, 1
    %s63 = scalar_select %p60, %s61, %s62
    %p66 = pneg %p60
    %p67 = scmp.eq.s32.totalorder %s9, 1
    %p68 = por %p66, %p67
    %p69 = scmp.ne.s32.totalorder %s61, %s64
    %p70 = scmp.eq.s32.totalorder %s9, 0
    %p71 = por %p69, %p70
    %p72 = scmp.ne.s32.totalorder %s61, %s64
    %p73 = scmp.eq.s32.totalorder %s14, 1
    %p74 = por %p72, %p73
    %p75 = scmp.ne.s32.totalorder %s64, %s65
    %p76 = scmp.eq.s32.totalorder %s14, 0
    %p77 = por %p75, %p76
    %p78 = scmp.ne.s32.totalorder %s64, %s65
    %p79 = scmp.eq.s32.totalorder %s15, 1
    %p80 = por %p78, %p79
    %p82 = scmp.ne.s32.totalorder %s65, %s81
    %p83 = scmp.eq.s32.totalorder %s15, 0
    %p84 = por %p82, %p83
    %s85 = ssub.s32 %s9, %s16
    %p86 = scmp.eq.s32.totalorder %s85, 0
    %s88 = sadd.s32 %s87, 1
    %s89 = scalar_select %p86, %s87, %s88
    %p92 = pneg %p86
    %p93 = scmp.eq.s32.totalorder %s9, 1
    %p94 = por %p92, %p93
    %p95 = scmp.ne.s32.totalorder %s87, %s90
    %p96 = scmp.eq.s32.totalorder %s9, 0
    %p97 = por %p95, %p96
    %p98 = scmp.ne.s32.totalorder %s87, %s90
    %p99 = scmp.eq.s32.totalorder %s14, 1
    %p100 = por %p98, %p99
    %p101 = scmp.ne.s32.totalorder %s90, %s91
    %p102 = scmp.eq.s32.totalorder %s14, 0
    %p103 = por %p101, %p102
    %p104 = scmp.ne.s32.totalorder %s90, %s91
    %p105 = scmp.eq.s32.totalorder %s15, 1
    %p106 = por %p104, %p105
    %p108 = scmp.ne.s32.totalorder %s91, %s107
    %p109 = scmp.eq.s32.totalorder %s15, 0
    %p110 = por %p108, %p109
    %p111 = scmp.le.s32.totalorder 1, %s9
    %p112 = scmp.lt.s32.totalorder %s9, 3
    %p113 = pnand %p111, %p112
    %p114 = pneg %p113
    // Predicated region
    $region9: #{conv3_forward.4} parent=5 // pred_check
      _
    $region10: #{conv3_forward.4} parent=5 // pred_check_branch
      %116 = sbr.rel (%p113) target = $region12
    $region11: #{conv3_forward.4} parent=5 // pred_region
      %s117 = ssub.s32 %s9, 1
      // Predicated region
      $region13: #{conv3_forward.4} parent=11 // pred_check
        %p118 = pneg %p30
      $region14: #{conv3_forward.4} parent=11 // pred_check_branch
        %120 = sbr.rel (%p118) target = $region16
      $region15: #{conv3_forward.4} parent=11 // pred_region
        _
      $region16: #{conv3_forward.4} parent=11 // pred_fallthru
        _
      // Predicated region
      $region17: #{conv3_forward.4} parent=11 // pred_check
        %p121 = pneg %p51
      $region18: #{conv3_forward.4} parent=11 // pred_check_branch
        %123 = sbr.rel (%p121) target = $region20
      $region19: #{conv3_forward.4} parent=11 // pred_region
        _
      $region20: #{conv3_forward.4} parent=11 // pred_fallthru
        _
    $region12: #{conv3_forward.4} parent=5 // pred_fallthru
      _
    %p124 = scmp.lt.s32.totalorder %s9, 2
    // Predicated region
    $region21: #{conv3_forward.4} parent=5 // pred_check
      %p125 = pneg %p124
    $region22: #{conv3_forward.4} parent=5 // pred_check_branch
      %127 = sbr.rel (%p125) target = $region24
    $region23: #{conv3_forward.4} parent=5 // pred_region
      // Predicated region
      $region25: #{conv3_forward.4} parent=23 // pred_check
        %p128 = pneg %p71
      $region26: #{conv3_forward.4} parent=23 // pred_check_branch
        %130 = sbr.rel (%p128) target = $region28
      $region27: #{conv3_forward.4} parent=23 // pred_region
        %p131 = scmp.lt.s32.totalorder %s9, 1
        %s132 = scalar_select %p131, %s9, 1
        %s133 = smul.addr %s132, 28
        %s134 = smul.addr %s133, 4
        %s135 = scalar_lea.vmem %s2, %s134
      $region28: #{conv3_forward.4} parent=23 // pred_fallthru
        _
    $region24: #{conv3_forward.4} parent=5 // pred_fallthru
      _
    %p136 = scmp.le.s32.totalorder 1, %s9
    %p137 = scmp.lt.s32.totalorder %s9, 3
    %p138 = pnand %p136, %p137
    %p139 = pneg %p138
    // Predicated region
    $region29: #{conv3_forward.4} parent=5 // pred_check
      _
    $region30: #{conv3_forward.4} parent=5 // pred_check_branch
      %141 = sbr.rel (%p138) target = $region32
    $region31: #{conv3_forward.4} parent=5 // pred_region
      %s142 = ssub.s32 %s9, 1
      %p143 = pneg %p30
      %p144 = pneg %p27
      %p145 = pneg %p51
      %p146 = pneg %p48
      %p147 = scmp.lt.s32.totalorder %s14, 1
      %s148 = scalar_select %p147, %s14, 1
      %s149 = smul.addr %s148, 28
      %s150 = smul.addr %s149, 4
      %s151 = scalar_lea.vmem %s2, %s150
      %p152 = pneg %p77
      %p153 = pneg %p74
      %p154 = pneg %p103
      %p155 = pneg %p100
      %p156 = scmp.lt.s32.totalorder %s14, 1
      %s157 = scalar_select %p156, %s14, 1
      %s158 = smul.addr %s157, 2
      %s159 = smul.addr %s158, 8
      %s160 = scalar_lea.vmem %s3, %s159
      %p161 = scmp.lt.s32.totalorder %s14, 1
      %s162 = scalar_select %p161, %s14, 1
      %s163 = smul.addr %s162, 28
      %s164 = smul.addr %s163, 4
      %s165 = scalar_lea.vmem %s2, %s164
      %p166 = scmp.lt.s32.totalorder %s14, 1
      %s167 = scalar_select %p166, %s14, 1
      %s168 = smul.addr %s167, 2
      %s169 = smul.addr %s168, 8
      %s170 = scalar_lea.vmem %s3, %s169
      %v172 = vld [vmem:[%s0] sm:$0xf]
      %v173 = vld [vmem:[%s0 + $0x4] sm:$0xf]
      %v174 = vld [vmem:[%s165] sm:$0xf]
      %v175 = vld [vmem:[%s165 + $0x4] sm:$0xf]
      %v176 = vld [vmem:[%s165 + $0x8] sm:$0xf]
      %v177 = vld [vmem:[%s165 + $0xc] sm:$0xf]
      %v178 = vld [vmem:[%s165 + $0x10] sm:$0xf]
      %v179 = vld [vmem:[%s165 + $0x14] sm:$0xf]
      %v180 = vld [vmem:[%s165 + $0x18] sm:$0x7]
      %v183 = vunpack.c.l.b16 %v172
      %v184 = vunpack.c.l.b16 %v173
      %v185 = vpack.c.b16 %v184, %v183
      %v193 = vunpack.c.l.b16 %v174
      %v194 = vunpack.c.l.b16 %v175
      %v195 = vunpack.c.l.b16 %v176
      %v196 = vunpack.c.l.b16 %v177
      %v197 = vunpack.c.l.b16 %v178
      %v198 = vunpack.c.l.b16 %v179
      %v199 = vunpack.c.l.b16 %v180
      %v200 = vpack.c.b16 %v194, %v193
      %v201 = vpack.c.b16 %v196, %v195
      %v202 = vpack.c.b16 %v198, %v197
      %v203 = vpack.c.b16 %v199, %v199
      %vm207 = vcmask 441344
      %v209 = vsel %vm207, %v185, 0
      %vm211 = vcmask 1042432
      %v213 = vsel %vm211, %v203, 0
      %215 = vmatpush.bf16.msra.mxu0 0
      %216 = vmatpush.bf16.msra.mxu0 0
      %217 = vmatpush.bf16.msra.mxu0 0
      %218 = vmatpush.bf16.msra.mxu0 0
      %219 = vmatpush.bf16.msra.mxu0 %v213
      %220 = vmatpush.bf16.msra.mxu0 %v202
      %221 = vmatpush.bf16.msra.mxu0 %v201
      %222 = vmatpush.bf16.msra.mxu0 %v200
      %223 = vmatmul.bf16.gmra.mxu0 %v209
      %v224 = vpop.f32.mrf.mxu0
      %v225 = vadd.f32 0.0, %v224
      %v226 = vpop.f32.mrf.mxu0
      %v227 = vadd.f32 0.0, %v226
      %228 = vdwg.mxu0
      %s229 = scalar_lea.vmem %s165, 28
      %v230 = vld [vmem:[%s229] sm:$0xf]
      %v231 = vld [vmem:[%s229 + $0x4] sm:$0xf]
      %v232 = vld [vmem:[%s229 + $0x8] sm:$0xf]
      %v233 = vld [vmem:[%s229 + $0xc] sm:$0xf]
      %v234 = vld [vmem:[%s229 + $0x10] sm:$0xf]
      %v235 = vld [vmem:[%s229 + $0x14] sm:$0xf]
      %v236 = vld [vmem:[%s229 + $0x18] sm:$0x7]
      %v244 = vunpack.c.l.b16 %v230
      %v245 = vunpack.c.l.b16 %v231
      %v246 = vunpack.c.l.b16 %v232
      %v247 = vunpack.c.l.b16 %v233
      %v248 = vunpack.c.l.b16 %v234
      %v249 = vunpack.c.l.b16 %v235
      %v250 = vunpack.c.l.b16 %v236
      %v251 = vpack.c.b16 %v245, %v244
      %v252 = vpack.c.b16 %v247, %v246
      %v253 = vpack.c.b16 %v249, %v248
      %v254 = vpack.c.b16 %v250, %v250
      %v259 = vsel %vm211, %v254, 0
      %261 = vmatpush.bf16.msra.mxu0 0
      %262 = vmatpush.bf16.msra.mxu0 0
      %263 = vmatpush.bf16.msra.mxu0 0
      %264 = vmatpush.bf16.msra.mxu0 0
      %265 = vmatpush.bf16.msra.mxu0 %v259
      %266 = vmatpush.bf16.msra.mxu0 %v253
      %267 = vmatpush.bf16.msra.mxu0 %v252
      %268 = vmatpush.bf16.msra.mxu0 %v251
      %269 = vmatmul.bf16.gmra.mxu0 %v209
      %v270 = vpop.f32.mrf.mxu0
      %v271 = vadd.f32 0.0, %v270
      %v272 = vpop.f32.mrf.mxu0
      %v273 = vadd.f32 0.0, %v272
      %274 = vdwg.mxu0
      %v275 = vmax.f32 %v225, %v271
      %v276 = vmax.f32 %v227, %v273
      %s277 = scalar_lea.vmem %s165, 56
      %v278 = vld [vmem:[%s277] sm:$0xf]
      %v279 = vld [vmem:[%s277 + $0x4] sm:$0xf]
      %v280 = vld [vmem:[%s277 + $0x8] sm:$0xf]
      %v281 = vld [vmem:[%s277 + $0xc] sm:$0xf]
      %v282 = vld [vmem:[%s277 + $0x10] sm:$0xf]
      %v283 = vld [vmem:[%s277 + $0x14] sm:$0xf]
      %v284 = vld [vmem:[%s277 + $0x18] sm:$0x7]
      %v292 = vunpack.c.l.b16 %v278
      %v293 = vunpack.c.l.b16 %v279
      %v294 = vunpack.c.l.b16 %v280
      %v295 = vunpack.c.l.b16 %v281
      %v296 = vunpack.c.l.b16 %v282
      %v297 = vunpack.c.l.b16 %v283
      %v298 = vunpack.c.l.b16 %v284
      %v299 = vpack.c.b16 %v293, %v292
      %v300 = vpack.c.b16 %v295, %v294
      %v301 = vpack.c.b16 %v297, %v296
      %v302 = vpack.c.b16 %v298, %v298
      %v307 = vsel %vm211, %v302, 0
      %309 = vmatpush.bf16.msra.mxu0 0
      %310 = vmatpush.bf16.msra.mxu0 0
      %311 = vmatpush.bf16.msra.mxu0 0
      %312 = vmatpush.bf16.msra.mxu0 0
      %313 = vmatpush.bf16.msra.mxu0 %v307
      %314 = vmatpush.bf16.msra.mxu0 %v301
      %315 = vmatpush.bf16.msra.mxu0 %v300
      %316 = vmatpush.bf16.msra.mxu0 %v299
      %317 = vmatmul.bf16.gmra.mxu0 %v209
      %v318 = vpop.f32.mrf.mxu0
      %v319 = vadd.f32 0.0, %v318
      %v320 = vpop.f32.mrf.mxu0
      %v321 = vadd.f32 0.0, %v320
      %322 = vdwg.mxu0
      %v323 = vmax.f32 %v275, %v319
      %v324 = vmax.f32 %v276, %v321
      %s325 = scalar_lea.vmem %s165, 84
      %v326 = vld [vmem:[%s325] sm:$0xf]
      %v327 = vld [vmem:[%s325 + $0x4] sm:$0xf]
      %v328 = vld [vmem:[%s325 + $0x8] sm:$0xf]
      %v329 = vld [vmem:[%s325 + $0xc] sm:$0xf]
      %v330 = vld [vmem:[%s325 + $0x10] sm:$0xf]
      %v331 = vld [vmem:[%s325 + $0x14] sm:$0xf]
      %v332 = vld [vmem:[%s325 + $0x18] sm:$0x7]
      %v340 = vunpack.c.l.b16 %v326
      %v341 = vunpack.c.l.b16 %v327
      %v342 = vunpack.c.l.b16 %v328
      %v343 = vunpack.c.l.b16 %v329
      %v344 = vunpack.c.l.b16 %v330
      %v345 = vunpack.c.l.b16 %v331
      %v346 = vunpack.c.l.b16 %v332
      %v347 = vpack.c.b16 %v341, %v340
      %v348 = vpack.c.b16 %v343, %v342
      %v349 = vpack.c.b16 %v345, %v344
      %v350 = vpack.c.b16 %v346, %v346
      %v355 = vsel %vm211, %v350, 0
      %357 = vmatpush.bf16.msra.mxu0 0
      %358 = vmatpush.bf16.msra.mxu0 0
      %359 = vmatpush.bf16.msra.mxu0 0
      %360 = vmatpush.bf16.msra.mxu0 0
      %361 = vmatpush.bf16.msra.mxu0 %v355
      %362 = vmatpush.bf16.msra.mxu0 %v349
      %363 = vmatpush.bf16.msra.mxu0 %v348
      %364 = vmatpush.bf16.msra.mxu0 %v347
      %365 = vmatmul.bf16.gmra.mxu0 %v209
      %v366 = vpop.f32.mrf.mxu0
      %v367 = vadd.f32 0.0, %v366
      %v368 = vpop.f32.mrf.mxu0
      %v369 = vadd.f32 0.0, %v368
      %370 = vdwg.mxu0
      %v371 = vmax.f32 %v323, %v367
      %v372 = vmax.f32 %v324, %v369
      %v373 = vld [vmem:[%s1] sm:$0xff]
      %v374 = vld [vmem:[%s1 + $0x8] sm:$0xff]
      %376 = vset.pattern.permute.xlu0 0
      %377 = vperm.xlu0 %376, %v373
      %v378 = vpop.permute.xlu0 %377
      %381 = vset.pattern.permute.xlu0 0
      %382 = vperm.xlu0 %381, %v374
      %v383 = vpop.permute.xlu0 %382
      %v385 = vadd.f32 %v371, %v378
      %v386 = vadd.f32 %v372, %v383
      %v387 = vmax.f32 %v385, 0.0
      %v388 = vmax.f32 %v386, 0.0
      %389 = vst [vmem:[%s170] sm:$0xff] %v387
      %390 = vst [vmem:[%s170 + $0x8] sm:$0xff] %v388
      %p391 = scmp.lt.s32.totalorder %s14, 1
      %s392 = scalar_select %p391, %s14, 1
      %s393 = smul.addr %s392, 2
      %s394 = smul.addr %s393, 8
      %s395 = scalar_lea.vmem %s3, %s394
      // Predicated region
      $region33: #{conv3_forward.4} parent=31 // pred_check
        %p396 = pneg %p100
      $region34: #{conv3_forward.4} parent=31 // pred_check_branch
        %398 = sbr.rel (%p396) target = $region36
      $region35: #{conv3_forward.4} parent=31 // pred_region
        _
      $region36: #{conv3_forward.4} parent=31 // pred_fallthru
        _
    $region32: #{conv3_forward.4} parent=5 // pred_fallthru
      _
    %p399 = scmp.le.s32.totalorder 2, %s9
    // Predicated region
    $region37: #{conv3_forward.4} parent=5 // pred_check
      %p400 = pneg %p399
    $region38: #{conv3_forward.4} parent=5 // pred_check_branch
      %402 = sbr.rel (%p400) target = $region40
    $region39: #{conv3_forward.4} parent=5 // pred_region
      %s403 = ssub.s32 %s9, 2
      // Predicated region
      $region41: #{conv3_forward.4} parent=39 // pred_check
        %p404 = pneg %p106
      $region42: #{conv3_forward.4} parent=39 // pred_check_branch
        %406 = sbr.rel (%p404) target = $region44
      $region43: #{conv3_forward.4} parent=39 // pred_region
        %p407 = scmp.lt.s32.totalorder %s15, 1
        %s408 = scalar_select %p407, %s15, 1
        %s409 = smul.addr %s408, 2
        %s410 = smul.addr %s409, 8
        %s411 = scalar_lea.vmem %s3, %s410
      $region44: #{conv3_forward.4} parent=39 // pred_fallthru
        _
    $region40: #{conv3_forward.4} parent=5 // pred_fallthru
      _
  $region6: #{conv3_forward.4} parent=0 // loop_footer
    %s13 = sadd.s32 1, %s9
  $region7: #{conv3_forward.4} parent=0 // loop_footer_branch
    %8 = sbr.rel target = $region3
  $region8: #{conv3_forward.4} parent=0 // loop_exit
    _

// kernel: conv3_forward.5
$region0: #{conv3_forward.5}
  #allocation0 [shape = 'u32[]', space=smem, size = 0x4, offset = 0x4, fixed_abs, tag = 'smem constant byte address 0x4 - core index']
  #allocation1 [shape = 'u32[72,128]{1,0:T(1,128)}', space=vmem, size = 0x9000, scoped, tag = 'internal scratch']
  #allocation2 [shape = 'f32[2,128]{1,0:T(2,128)}', space=vmem, size = 0x400, scoped, tag = 'scratch operand']
  %s0 = inlined_call_operand.vmem [shape: bf16[2,640], index: 0, kind: input, shape index: {}]
  %s1 = inlined_call_operand.vmem [shape: bf16[640,128], index: 1, kind: input, shape index: {}]
  %s2 = inlined_call_operand.vmem [shape: f32[1,128], index: 2, kind: input, shape index: {}]
  %s3 = inlined_call_operand.vmem [shape: bf16[128,128], index: 3, kind: input, shape index: {}]
  %s4 = inlined_call_operand.vmem [shape: f32[1,128], index: 4, kind: input, shape index: {}]
  %s5 = inlined_call_operand.vmem [shape: bf16[128,128], index: 5, kind: input, shape index: {}]
  %s6 = inlined_call_operand.vmem [shape: f32[1,128], index: 6, kind: input, shape index: {}]
  %s7 = inlined_call_operand.hbm [shape: f32[2,128], index: 7, kind: output, shape index: {}]
  %s8 = sld [smem:[#allocation0]]
  $region46: #{conv3_forward.5} parent=0
    _
  %s10 = ssub.s32 1, %s8
  %s11 = scalar_select 0, %s10, %s8
  $region1: #{conv3_forward.5} parent=0
    #allocation3 [shape = 'u8[1024]{0}', space=vmem, size = 0x400, scoped, tag = 'output window, operand 0, single buffered']
    #allocation4 [shape = 's32[1]{0}', space=sflag, size = 0x4, scoped, tag = 'scoped memory for conv3_forward.5']
    %12 = vsyncpa [#allocation4], 0
    // Predicated region
    $region2: #{conv3_forward.5} parent=1 // pred_check
      _
    $region3: #{conv3_forward.5} parent=1 // pred_check_branch
      %14 = sbr.rel (0) target = $region5
    $region4: #{conv3_forward.5} parent=1 // pred_region
      _
    $region5: #{conv3_forward.5} parent=1 // pred_fallthru
      _
    // Predicated region
    $region6: #{conv3_forward.5} parent=1 // pred_check
      _
    $region7: #{conv3_forward.5} parent=1 // pred_check_branch
      %16 = sbr.rel (0) target = $region9
    $region8: #{conv3_forward.5} parent=1 // pred_region
      _
    $region9: #{conv3_forward.5} parent=1 // pred_fallthru
      _
    // Predicated region
    $region10: #{conv3_forward.5} parent=1 // pred_check
      _
    $region11: #{conv3_forward.5} parent=1 // pred_check_branch
      %18 = sbr.rel (0) target = $region13
    $region12: #{conv3_forward.5} parent=1 // pred_region
      _
    $region13: #{conv3_forward.5} parent=1 // pred_fallthru
      _
    // Predicated region
    $region14: #{conv3_forward.5} parent=1 // pred_check
      _
    $region15: #{conv3_forward.5} parent=1 // pred_check_branch
      %20 = sbr.rel (0) target = $region17
    $region16: #{conv3_forward.5} parent=1 // pred_region
      _
    $region17: #{conv3_forward.5} parent=1 // pred_fallthru
      _
    // Predicated region
    $region18: #{conv3_forward.5} parent=1 // pred_check
      _
    $region19: #{conv3_forward.5} parent=1 // pred_check_branch
      %22 = sbr.rel (0) target = $region21
    $region20: #{conv3_forward.5} parent=1 // pred_region
      _
    $region21: #{conv3_forward.5} parent=1 // pred_fallthru
      _
    // Predicated region
    $region22: #{conv3_forward.5} parent=1 // pred_check
      _
    $region23: #{conv3_forward.5} parent=1 // pred_check_branch
      %24 = sbr.rel (0) target = $region25
    $region24: #{conv3_forward.5} parent=1 // pred_region
      _
    $region25: #{conv3_forward.5} parent=1 // pred_fallthru
      _
    // Predicated region
    $region26: #{conv3_forward.5} parent=1 // pred_check
      _
    $region27: #{conv3_forward.5} parent=1 // pred_check_branch
      %26 = sbr.rel (0) target = $region29
    $region28: #{conv3_forward.5} parent=1 // pred_region
      _
    $region29: #{conv3_forward.5} parent=1 // pred_fallthru
      _
    %p27 = scmp.eq.s32.totalorder 0, 0
    // Predicated region
    $region30: #{conv3_forward.5} parent=1 // pred_check
      %p28 = pneg %p27
    $region31: #{conv3_forward.5} parent=1 // pred_check_branch
      %30 = sbr.rel (%p28) target = $region33
    $region32: #{conv3_forward.5} parent=1 // pred_region
      %31 = vst [vmem:[#allocation2] sm:$0x3] 0.0
    $region33: #{conv3_forward.5} parent=1 // pred_fallthru
      _
    %v32 = vld [vmem:[#allocation2] sm:$0x3]
    %v33 = vld [vmem:[%s0] sm:$0x1f]
    %v34 = vld [vmem:[%s1] sm:$0xf]
    %v35 = vld [vmem:[%s1 + $0x4] sm:$0xf]
    %v36 = vld [vmem:[%s1 + $0x8] sm:$0xf]
    %v37 = vld [vmem:[%s1 + $0xc] sm:$0xf]
    %v38 = vld [vmem:[%s1 + $0x10] sm:$0xf]
    %v39 = vld [vmem:[%s1 + $0x14] sm:$0xf]
    %v40 = vld [vmem:[%s1 + $0x18] sm:$0xf]
    %v41 = vld [vmem:[%s1 + $0x1c] sm:$0xf]
    %v42 = vld [vmem:[%s1 + $0x20] sm:$0xf]
    %v43 = vld [vmem:[%s1 + $0x24] sm:$0xf]
    %v44 = vld [vmem:[%s1 + $0x28] sm:$0xf]
    %v45 = vld [vmem:[%s1 + $0x2c] sm:$0xf]
    %v46 = vld [vmem:[%s1 + $0x30] sm:$0xf]
    %v47 = vld [vmem:[%s1 + $0x34] sm:$0xf]
    %v48 = vld [vmem:[%s1 + $0x38] sm:$0xf]
    %v49 = vld [vmem:[%s1 + $0x3c] sm:$0xf]
    %v50 = vld [vmem:[%s1 + $0x40] sm:$0xf]
    %v51 = vld [vmem:[%s1 + $0x44] sm:$0xf]
    %v52 = vld [vmem:[%s1 + $0x48] sm:$0xf]
    %v53 = vld [vmem:[%s1 + $0x4c] sm:$0xf]
    %v54 = vld [vmem:[%s1 + $0x50] sm:$0xf]
    %v55 = vld [vmem:[%s1 + $0x54] sm:$0xf]
    %v56 = vld [vmem:[%s1 + $0x58] sm:$0xf]
    %v57 = vld [vmem:[%s1 + $0x5c] sm:$0xf]
    %v58 = vld [vmem:[%s1 + $0x60] sm:$0xf]
    %v59 = vld [vmem:[%s1 + $0x64] sm:$0xf]
    %v60 = vld [vmem:[%s1 + $0x68] sm:$0xf]
    %v61 = vld [vmem:[%s1 + $0x6c] sm:$0xf]
    %v62 = vld [vmem:[%s1 + $0x70] sm:$0xf]
    %v63 = vld [vmem:[%s1 + $0x74] sm:$0xf]
    %v64 = vld [vmem:[%s1 + $0x78] sm:$0xf]
    %v65 = vld [vmem:[%s1 + $0x7c] sm:$0xf]
    %v66 = vld [vmem:[%s1 + $0x80] sm:$0xf]
    %v67 = vld [vmem:[%s1 + $0x84] sm:$0xf]
    %v68 = vld [vmem:[%s1 + $0x88] sm:$0xf]
    %v69 = vld [vmem:[%s1 + $0x8c] sm:$0xf]
    %v70 = vld [vmem:[%s1 + $0x90] sm:$0xf]
    %v71 = vld [vmem:[%s1 + $0x94] sm:$0xf]
    %v72 = vld [vmem:[%s1 + $0x98] sm:$0xf]
    %v73 = vld [vmem:[%s1 + $0x9c] sm:$0xf]
    %v74 = vld [vmem:[%s1 + $0xa0] sm:$0xf]
    %v75 = vld [vmem:[%s1 + $0xa4] sm:$0xf]
    %v76 = vld [vmem:[%s1 + $0xa8] sm:$0xf]
    %v77 = vld [vmem:[%s1 + $0xac] sm:$0xf]
    %v78 = vld [vmem:[%s1 + $0xb0] sm:$0xf]
    %v79 = vld [vmem:[%s1 + $0xb4] sm:$0xf]
    %v80 = vld [vmem:[%s1 + $0xb8] sm:$0xf]
    %v81 = vld [vmem:[%s1 + $0xbc] sm:$0xf]
    %v82 = vld [vmem:[%s1 + $0xc0] sm:$0xf]
    %v83 = vld [vmem:[%s1 + $0xc4] sm:$0xf]
    %v84 = vld [vmem:[%s1 + $0xc8] sm:$0xf]
    %v85 = vld [vmem:[%s1 + $0xcc] sm:$0xf]
    %v86 = vld [vmem:[%s1 + $0xd0] sm:$0xf]
    %v87 = vld [vmem:[%s1 + $0xd4] sm:$0xf]
    %v88 = vld [vmem:[%s1 + $0xd8] sm:$0xf]
    %v89 = vld [vmem:[%s1 + $0xdc] sm:$0xf]
    %v90 = vld [vmem:[%s1 + $0xe0] sm:$0xf]
    %v91 = vld [vmem:[%s1 + $0xe4] sm:$0xf]
    %v92 = vld [vmem:[%s1 + $0xe8] sm:$0xf]
    %v93 = vld [vmem:[%s1 + $0xec] sm:$0xf]
    %v94 = vld [vmem:[%s1 + $0xf0] sm:$0xf]
    %v95 = vld [vmem:[%s1 + $0xf4] sm:$0xf]
    %v96 = vld [vmem:[%s1 + $0xf8] sm:$0xf]
    %v97 = vld [vmem:[%s1 + $0xfc] sm:$0xf]
    %v98 = vld [vmem:[%s1 + $0x100] sm:$0xf]
    %v99 = vld [vmem:[%s1 + $0x104] sm:$0xf]
    %v100 = vld [vmem:[%s1 + $0x108] sm:$0xf]
    %v101 = vld [vmem:[%s1 + $0x10c] sm:$0xf]
    %v102 = vld [vmem:[%s1 + $0x110] sm:$0xf]
    %v103 = vld [vmem:[%s1 + $0x114] sm:$0xf]
    %v104 = vld [vmem:[%s1 + $0x118] sm:$0xf]
    %v105 = vld [vmem:[%s1 + $0x11c] sm:$0xf]
    %v106 = vld [vmem:[%s1 + $0x120] sm:$0xf]
    %v107 = vld [vmem:[%s1 + $0x124] sm:$0xf]
    %v108 = vld [vmem:[%s1 + $0x128] sm:$0xf]
    %v109 = vld [vmem:[%s1 + $0x12c] sm:$0xf]
    %v110 = vld [vmem:[%s1 + $0x130] sm:$0xf]
    %v111 = vld [vmem:[%s1 + $0x134] sm:$0xf]
    %v112 = vld [vmem:[%s1 + $0x138] sm:$0xf]
    %v113 = vld [vmem:[%s1 + $0x13c] sm:$0xf]
    %115 = vst [vmem:[#allocation1] ss:$9 sm:$0xff] %v33
    %v116 = vld [vmem:[#allocation1] sm:$0xff]
    %v117 = vld [vmem:[#allocation1 + $0x9] sm:$0xff]
    %v118 = vld [vmem:[#allocation1 + $0x12] sm:$0xff]
    %v119 = vld [vmem:[#allocation1 + $0x1b] sm:$0xff]
    %v120 = vld [vmem:[#allocation1 + $0x24] sm:$0xff]
    %v206 = vunpack.c.l.b16 %v34
    %v207 = vunpack.c.l.b16 %v35
    %v208 = vunpack.c.l.b16 %v36
    %v209 = vunpack.c.l.b16 %v37
    %v210 = vunpack.c.l.b16 %v38
    %v211 = vunpack.c.l.b16 %v39
    %v212 = vunpack.c.l.b16 %v40
    %v213 = vunpack.c.l.b16 %v41
    %v214 = vunpack.c.l.b16 %v42
    %v215 = vunpack.c.l.b16 %v43
    %v216 = vunpack.c.l.b16 %v44
    %v217 = vunpack.c.l.b16 %v45
    %v218 = vunpack.c.l.b16 %v46
    %v219 = vunpack.c.l.b16 %v47
    %v220 = vunpack.c.l.b16 %v48
    %v221 = vunpack.c.l.b16 %v49
    %v222 = vunpack.c.l.b16 %v50
    %v223 = vunpack.c.l.b16 %v51
    %v224 = vunpack.c.l.b16 %v52
    %v225 = vunpack.c.l.b16 %v53
    %v226 = vunpack.c.l.b16 %v54
    %v227 = vunpack.c.l.b16 %v55
    %v228 = vunpack.c.l.b16 %v56
    %v229 = vunpack.c.l.b16 %v57
    %v230 = vunpack.c.l.b16 %v58
    %v231 = vunpack.c.l.b16 %v59
    %v232 = vunpack.c.l.b16 %v60
    %v233 = vunpack.c.l.b16 %v61
    %v234 = vunpack.c.l.b16 %v62
    %v235 = vunpack.c.l.b16 %v63
    %v236 = vunpack.c.l.b16 %v64
    %v237 = vunpack.c.l.b16 %v65
    %v238 = vunpack.c.l.b16 %v66
    %v239 = vunpack.c.l.b16 %v67
    %v240 = vunpack.c.l.b16 %v68
    %v241 = vunpack.c.l.b16 %v69
    %v242 = vunpack.c.l.b16 %v70
    %v243 = vunpack.c.l.b16 %v71
    %v244 = vunpack.c.l.b16 %v72
    %v245 = vunpack.c.l.b16 %v73
    %v246 = vunpack.c.l.b16 %v74
    %v247 = vunpack.c.l.b16 %v75
    %v248 = vunpack.c.l.b16 %v76
    %v249 = vunpack.c.l.b16 %v77
    %v250 = vunpack.c.l.b16 %v78
    %v251 = vunpack.c.l.b16 %v79
    %v252 = vunpack.c.l.b16 %v80
    %v253 = vunpack.c.l.b16 %v81
    %v254 = vunpack.c.l.b16 %v82
    %v255 = vunpack.c.l.b16 %v83
    %v256 = vunpack.c.l.b16 %v84
    %v257 = vunpack.c.l.b16 %v85
    %v258 = vunpack.c.l.b16 %v86
    %v259 = vunpack.c.l.b16 %v87
    %v260 = vunpack.c.l.b16 %v88
    %v261 = vunpack.c.l.b16 %v89
    %v262 = vunpack.c.l.b16 %v90
    %v263 = vunpack.c.l.b16 %v91
    %v264 = vunpack.c.l.b16 %v92
    %v265 = vunpack.c.l.b16 %v93
    %v266 = vunpack.c.l.b16 %v94
    %v267 = vunpack.c.l.b16 %v95
    %v268 = vunpack.c.l.b16 %v96
    %v269 = vunpack.c.l.b16 %v97
    %v270 = vunpack.c.l.b16 %v98
    %v271 = vunpack.c.l.b16 %v99
    %v272 = vunpack.c.l.b16 %v100
    %v273 = vunpack.c.l.b16 %v101
    %v274 = vunpack.c.l.b16 %v102
    %v275 = vunpack.c.l.b16 %v103
    %v276 = vunpack.c.l.b16 %v104
    %v277 = vunpack.c.l.b16 %v105
    %v278 = vunpack.c.l.b16 %v106
    %v279 = vunpack.c.l.b16 %v107
    %v280 = vunpack.c.l.b16 %v108
    %v281 = vunpack.c.l.b16 %v109
    %v282 = vunpack.c.l.b16 %v110
    %v283 = vunpack.c.l.b16 %v111
    %v284 = vunpack.c.l.b16 %v112
    %v285 = vunpack.c.l.b16 %v113
    %v286 = vpack.c.b16 %v207, %v206
    %v287 = vpack.c.b16 %v209, %v208
    %v288 = vpack.c.b16 %v211, %v210
    %v289 = vpack.c.b16 %v213, %v212
    %v290 = vpack.c.b16 %v215, %v214
    %v291 = vpack.c.b16 %v217, %v216
    %v292 = vpack.c.b16 %v219, %v218
    %v293 = vpack.c.b16 %v221, %v220
    %v294 = vpack.c.b16 %v223, %v222
    %v295 = vpack.c.b16 %v225, %v224
    %v296 = vpack.c.b16 %v227, %v226
    %v297 = vpack.c.b16 %v229, %v228
    %v298 = vpack.c.b16 %v231, %v230
    %v299 = vpack.c.b16 %v233, %v232
    %v300 = vpack.c.b16 %v235, %v234
    %v301 = vpack.c.b16 %v237, %v236
    %v302 = vpack.c.b16 %v239, %v238
    %v303 = vpack.c.b16 %v241, %v240
    %v304 = vpack.c.b16 %v243, %v242
    %v305 = vpack.c.b16 %v245, %v244
    %v306 = vpack.c.b16 %v247, %v246
    %v307 = vpack.c.b16 %v249, %v248
    %v308 = vpack.c.b16 %v251, %v250
    %v309 = vpack.c.b16 %v253, %v252
    %v310 = vpack.c.b16 %v255, %v254
    %v311 = vpack.c.b16 %v257, %v256
    %v312 = vpack.c.b16 %v259, %v258
    %v313 = vpack.c.b16 %v261, %v260
    %v314 = vpack.c.b16 %v263, %v262
    %v315 = vpack.c.b16 %v265, %v264
    %v316 = vpack.c.b16 %v267, %v266
    %v317 = vpack.c.b16 %v269, %v268
    %v318 = vpack.c.b16 %v271, %v270
    %v319 = vpack.c.b16 %v273, %v272
    %v320 = vpack.c.b16 %v275, %v274
    %v321 = vpack.c.b16 %v277, %v276
    %v322 = vpack.c.b16 %v279, %v278
    %v323 = vpack.c.b16 %v281, %v280
    %v324 = vpack.c.b16 %v283, %v282
    %v325 = vpack.c.b16 %v285, %v284
    %366 = vmatpush.bf16.msra.mxu0 %v293
    %367 = vmatpush.bf16.msra.mxu0 %v292
    %368 = vmatpush.bf16.msra.mxu0 %v291
    %369 = vmatpush.bf16.msra.mxu0 %v290
    %370 = vmatpush.bf16.msra.mxu0 %v289
    %371 = vmatpush.bf16.msra.mxu0 %v288
    %372 = vmatpush.bf16.msra.mxu0 %v287
    %373 = vmatpush.bf16.msra.mxu0 %v286
    %374 = vmatmul.bf16.gmra.mxu0 %v116
    %v375 = vpop.f32.mrf.mxu0
    %v376 = vadd.f32 0.0, %v375
    %v377 = vpop.f32.mrf.mxu0
    %378 = vdwg.mxu0
    %379 = vmatpush.bf16.msra.mxu0 %v301
    %380 = vmatpush.bf16.msra.mxu0 %v300
    %381 = vmatpush.bf16.msra.mxu0 %v299
    %382 = vmatpush.bf16.msra.mxu0 %v298
    %383 = vmatpush.bf16.msra.mxu0 %v297
    %384 = vmatpush.bf16.msra.mxu0 %v296
    %385 = vmatpush.bf16.msra.mxu0 %v295
    %386 = vmatpush.bf16.msra.mxu0 %v294
    %387 = vmatmul.bf16.gmra.mxu0 %v117
    %v388 = vpop.f32.mrf.mxu0
    %v389 = vadd.f32 %v376, %v388
    %v390 = vpop.f32.mrf.mxu0
    %391 = vdwg.mxu0
    %392 = vmatpush.bf16.msra.mxu0 %v309
    %393 = vmatpush.bf16.msra.mxu0 %v308
    %394 = vmatpush.bf16.msra.mxu0 %v307
    %395 = vmatpush.bf16.msra.mxu0 %v306
    %396 = vmatpush.bf16.msra.mxu0 %v305
    %397 = vmatpush.bf16.msra.mxu0 %v304
    %398 = vmatpush.bf16.msra.mxu0 %v303
    %399 = vmatpush.bf16.msra.mxu0 %v302
    %400 = vmatmul.bf16.gmra.mxu0 %v118
    %v401 = vpop.f32.mrf.mxu0
    %v402 = vadd.f32 %v389, %v401
    %v403 = vpop.f32.mrf.mxu0
    %404 = vdwg.mxu0
    %405 = vmatpush.bf16.msra.mxu0 %v317
    %406 = vmatpush.bf16.msra.mxu0 %v316
    %407 = vmatpush.bf16.msra.mxu0 %v315
    %408 = vmatpush.bf16.msra.mxu0 %v314
    %409 = vmatpush.bf16.msra.mxu0 %v313
    %410 = vmatpush.bf16.msra.mxu0 %v312
    %411 = vmatpush.bf16.msra.mxu0 %v311
    %412 = vmatpush.bf16.msra.mxu0 %v310
    %413 = vmatmul.bf16.gmra.mxu0 %v119
    %v414 = vpop.f32.mrf.mxu0
    %v415 = vadd.f32 %v402, %v414
    %v416 = vpop.f32.mrf.mxu0
    %417 = vdwg.mxu0
    %418 = vmatpush.bf16.msra.mxu0 %v325
    %419 = vmatpush.bf16.msra.mxu0 %v324
    %420 = vmatpush.bf16.msra.mxu0 %v323
    %421 = vmatpush.bf16.msra.mxu0 %v322
    %422 = vmatpush.bf16.msra.mxu0 %v321
    %423 = vmatpush.bf16.msra.mxu0 %v320
    %424 = vmatpush.bf16.msra.mxu0 %v319
    %425 = vmatpush.bf16.msra.mxu0 %v318
    %426 = vmatmul.bf16.gmra.mxu0 %v120
    %v427 = vpop.f32.mrf.mxu0
    %v428 = vadd.f32 %v415, %v427
    %v429 = vpop.f32.mrf.mxu0
    %430 = vdwg.mxu0
    %v431 = vadd.f32 %v32, %v428
    %432 = vst [vmem:[#allocation2] sm:$0x3] %v431
    // Predicated region
    $region34: #{conv3_forward.5} parent=1 // pred_check
      %p433 = pneg %p27
    $region35: #{conv3_forward.5} parent=1 // pred_check_branch
      %435 = sbr.rel (%p433) target = $region37
    $region36: #{conv3_forward.5} parent=1 // pred_region
      %v436 = vld [vmem:[#allocation2] sm:$0x3]
      %v437 = vld [vmem:[%s2] sm:$0x1]
      %v439 = vperm.slane %v437, 0
      %v441 = vadd.f32 %v436, %v439
      %v442 = vmax.f32 %v441, 0.0
      %v443 = vpack.c.bf16 %v442, %v442
      %v444 = vld [vmem:[%s3] sm:$0xf]
      %v445 = vld [vmem:[%s3 + $0x4] sm:$0xf]
      %v446 = vld [vmem:[%s3 + $0x8] sm:$0xf]
      %v447 = vld [vmem:[%s3 + $0xc] sm:$0xf]
      %v448 = vld [vmem:[%s3 + $0x10] sm:$0xf]
      %v449 = vld [vmem:[%s3 + $0x14] sm:$0xf]
      %v450 = vld [vmem:[%s3 + $0x18] sm:$0xf]
      %v451 = vld [vmem:[%s3 + $0x1c] sm:$0xf]
      %v452 = vld [vmem:[%s3 + $0x20] sm:$0xf]
      %v453 = vld [vmem:[%s3 + $0x24] sm:$0xf]
      %v454 = vld [vmem:[%s3 + $0x28] sm:$0xf]
      %v455 = vld [vmem:[%s3 + $0x2c] sm:$0xf]
      %v456 = vld [vmem:[%s3 + $0x30] sm:$0xf]
      %v457 = vld [vmem:[%s3 + $0x34] sm:$0xf]
      %v458 = vld [vmem:[%s3 + $0x38] sm:$0xf]
      %v459 = vld [vmem:[%s3 + $0x3c] sm:$0xf]
      %v460 = vld [vmem:[%s4] sm:$0x1]
      %v462 = vperm.slane %v460, 0
      %v480 = vunpack.c.l.b16 %v444
      %v481 = vunpack.c.l.b16 %v445
      %v482 = vunpack.c.l.b16 %v446
      %v483 = vunpack.c.l.b16 %v447
      %v484 = vunpack.c.l.b16 %v448
      %v485 = vunpack.c.l.b16 %v449
      %v486 = vunpack.c.l.b16 %v450
      %v487 = vunpack.c.l.b16 %v451
      %v488 = vunpack.c.l.b16 %v452
      %v489 = vunpack.c.l.b16 %v453
      %v490 = vunpack.c.l.b16 %v454
      %v491 = vunpack.c.l.b16 %v455
      %v492 = vunpack.c.l.b16 %v456
      %v493 = vunpack.c.l.b16 %v457
      %v494 = vunpack.c.l.b16 %v458
      %v495 = vunpack.c.l.b16 %v459
      %v496 = vpack.c.b16 %v481, %v480
      %v497 = vpack.c.b16 %v483, %v482
      %v498 = vpack.c.b16 %v485, %v484
      %v499 = vpack.c.b16 %v487, %v486
      %v500 = vpack.c.b16 %v489, %v488
      %v501 = vpack.c.b16 %v491, %v490
      %v502 = vpack.c.b16 %v493, %v492
      %v503 = vpack.c.b16 %v495, %v494
      %512 = vmatpush.bf16.msra.mxu0 %v503
      %513 = vmatpush.bf16.msra.mxu0 %v502
      %514 = vmatpush.bf16.msra.mxu0 %v501
      %515 = vmatpush.bf16.msra.mxu0 %v500
      %516 = vmatpush.bf16.msra.mxu0 %v499
      %517 = vmatpush.bf16.msra.mxu0 %v498
      %518 = vmatpush.bf16.msra.mxu0 %v497
      %519 = vmatpush.bf16.msra.mxu0 %v496
      %520 = vmatmul.bf16.gmra.mxu0 %v443
      %v521 = vpop.f32.mrf.mxu0
      %v522 = vadd.f32 %v462, %v521
      %v523 = vpop.f32.mrf.mxu0
      %524 = vdwg.mxu0
      %v525 = vmax.f32 %v522, 0.0
      %v526 = vpack.c.bf16 %v525, %v525
      %v527 = vld [vmem:[%s5] sm:$0xf]
      %v528 = vld [vmem:[%s5 + $0x4] sm:$0xf]
      %v529 = vld [vmem:[%s5 + $0x8] sm:$0xf]
      %v530 = vld [vmem:[%s5 + $0xc] sm:$0xf]
      %v531 = vld [vmem:[%s5 + $0x10] sm:$0xf]
      %v532 = vld [vmem:[%s5 + $0x14] sm:$0xf]
      %v533 = vld [vmem:[%s5 + $0x18] sm:$0xf]
      %v534 = vld [vmem:[%s5 + $0x1c] sm:$0xf]
      %v535 = vld [vmem:[%s5 + $0x20] sm:$0xf]
      %v536 = vld [vmem:[%s5 + $0x24] sm:$0xf]
      %v537 = vld [vmem:[%s5 + $0x28] sm:$0xf]
      %v538 = vld [vmem:[%s5 + $0x2c] sm:$0xf]
      %v539 = vld [vmem:[%s5 + $0x30] sm:$0xf]
      %v540 = vld [vmem:[%s5 + $0x34] sm:$0xf]
      %v541 = vld [vmem:[%s5 + $0x38] sm:$0xf]
      %v542 = vld [vmem:[%s5 + $0x3c] sm:$0xf]
      %v543 = vld [vmem:[%s6] sm:$0x1]
      %v545 = vperm.slane %v543, 0
      %v563 = vunpack.c.l.b16 %v527
      %v564 = vunpack.c.l.b16 %v528
      %v565 = vunpack.c.l.b16 %v529
      %v566 = vunpack.c.l.b16 %v530
      %v567 = vunpack.c.l.b16 %v531
      %v568 = vunpack.c.l.b16 %v532
      %v569 = vunpack.c.l.b16 %v533
      %v570 = vunpack.c.l.b16 %v534
      %v571 = vunpack.c.l.b16 %v535
      %v572 = vunpack.c.l.b16 %v536
      %v573 = vunpack.c.l.b16 %v537
      %v574 = vunpack.c.l.b16 %v538
      %v575 = vunpack.c.l.b16 %v539
      %v576 = vunpack.c.l.b16 %v540
      %v577 = vunpack.c.l.b16 %v541
      %v578 = vunpack.c.l.b16 %v542
      %v579 = vpack.c.b16 %v564, %v563
      %v580 = vpack.c.b16 %v566, %v565
      %v581 = vpack.c.b16 %v568, %v567
      %v582 = vpack.c.b16 %v570, %v569
      %v583 = vpack.c.b16 %v572, %v571
      %v584 = vpack.c.b16 %v574, %v573
      %v585 = vpack.c.b16 %v576, %v575
      %v586 = vpack.c.b16 %v578, %v577
      %595 = vmatpush.bf16.msra.mxu0 %v586
      %596 = vmatpush.bf16.msra.mxu0 %v585
      %597 = vmatpush.bf16.msra.mxu0 %v584
      %598 = vmatpush.bf16.msra.mxu0 %v583
      %599 = vmatpush.bf16.msra.mxu0 %v582
      %600 = vmatpush.bf16.msra.mxu0 %v581
      %601 = vmatpush.bf16.msra.mxu0 %v580
      %602 = vmatpush.bf16.msra.mxu0 %v579
      %603 = vmatmul.bf16.gmra.mxu0 %v526
      %v604 = vpop.f32.mrf.mxu0
      %v605 = vadd.f32 %v545, %v604
      %v606 = vpop.f32.mrf.mxu0
      %607 = vdwg.mxu0
      %608 = vst [vmem:[#allocation3] sm:$0x3] %v605
    $region37: #{conv3_forward.5} parent=1 // pred_fallthru
      _
    // Predicated region
    $region38: #{conv3_forward.5} parent=1 // pred_check
      _
    $region39: #{conv3_forward.5} parent=1 // pred_check_branch
      %610 = sbr.rel (0) target = $region41
    $region40: #{conv3_forward.5} parent=1 // pred_region
      %612 = vsyncadd [#allocation4], 0
      %s614 = sshll.u32 [#allocation3], 4
      %s615 = int_to_ptr.vmem [resolvable:$true] %s614
      %s616 = sshll.u32 %s7, 4
      %s617 = int_to_ptr.hbm [resolvable:$true] %s616
      %619 = dma.vmem_to_hbm [thread:$0]  %s615, 32, %s617, [#allocation4]
    $region41: #{conv3_forward.5} parent=1 // pred_fallthru
      _
    // Predicated region
    $region42: #{conv3_forward.5} parent=1 // pred_check
      _
    $region43: #{conv3_forward.5} parent=1 // pred_check_branch
      %621 = sbr.rel (0) target = $region45
    $region44: #{conv3_forward.5} parent=1 // pred_region
      %623 = dma.done [#allocation4], 32
    $region45: #{conv3_forward.5} parent=1 // pred_fallthru
      _
    %624 = vsyncpa [#allocation4], 1

</llo_original>
